<compile_context>
chip_gen: v6e
topology: v6e:2x2x1
jax: 0.10.0
libtpu: 0.0.40
codegen_flags: <defaults>
</compile_context>

<pallas_src>
import functools

import jax
import jax.numpy as jnp
from jax import lax
from jax.experimental import pallas as pl
from jax.experimental.pallas import tpu as pltpu


def _round_up(x, m):
    return ((x + m - 1) // m) * m


# ----------------------------------------------------------------------------
# Fused GEMM Pallas kernel:
#   out = [relu]( (A @ B) * scale + bias [+ A] )     (A reused as residual for
#                                                      the 1x1-shortcut case)
# Single full-K / full-N block per grid step; bf16 operands, f32 epilogue,
# bf16 store.
# ----------------------------------------------------------------------------
def _gemm_kernel(a_ref, b_ref, s_ref, t_ref, o_ref, *, relu, add_a):
    a = a_ref[...]
    out = jnp.dot(a, b_ref[...], preferred_element_type=jnp.float32)
    out = out * s_ref[...] + t_ref[...]
    if add_a:
        out = out + a.astype(jnp.float32)
    if relu:
        out = jnp.maximum(out, 0.0)
    o_ref[...] = out.astype(o_ref.dtype)


def _pick_bm(M, cap=1024):
    """Biggest M tile <= cap that avoids M padding when possible."""
    if M <= cap:
        bm = _round_up(M, 16)           # single full-M block
        return bm, bm
    for cand in range(cap, 15, -16):    # multiples of 16 (bf16 sublane pack)
        if M % cand == 0:
            return cand, M              # exact tiling, no pad
    return cap, _round_up(M, cap)       # fallback: pad M


def fused_matmul(a, b, scale, bias, *, relu, add_a=False, bm_cap=1024):
    """C[M,N] = epilogue(A[M,K] @ B[K,N]); bf16 in, f32 epilogue, bf16 out."""
    M, K = a.shape
    _, N = b.shape
    Kp = _round_up(K, 8)                # stem K=27 -> 32, not 128 (no waste)
    Np = _round_up(N, 128)              # lane-dense output
    bm, Mp = _pick_bm(M, bm_cap)

    a_p = a.astype(jnp.bfloat16)
    if (Mp, Kp) != (M, K):
        a_p = jnp.pad(a_p, ((0, Mp - M), (0, Kp - K)))
    b_p = b.astype(jnp.bfloat16)
    if (Kp, Np) != (K, N):
        b_p = jnp.pad(b_p, ((0, Kp - K), (0, Np - N)))
    s_p = jnp.pad(scale.astype(jnp.float32), (0, Np - N)).reshape(1, Np)
    t_p = jnp.pad(bias.astype(jnp.float32), (0, Np - N)).reshape(1, Np)

    if add_a:
        assert Kp == Np, (Kp, Np)       # residual == GEMM input (1x1 shortcut)

    kernel = functools.partial(_gemm_kernel, relu=relu, add_a=add_a)
    out = pl.pallas_call(
        kernel,
        out_shape=jax.ShapeDtypeStruct((Mp, Np), jnp.bfloat16),
        grid_spec=pltpu.PrefetchScalarGridSpec(
            num_scalar_prefetch=0,
            grid=(Mp // bm,),
            in_specs=[
                pl.BlockSpec((bm, Kp), lambda i: (i, 0)),
                pl.BlockSpec((Kp, Np), lambda i: (0, 0)),   # weights: resident
                pl.BlockSpec((1, Np), lambda i: (0, 0)),    # scale: resident
                pl.BlockSpec((1, Np), lambda i: (0, 0)),    # bias: resident
            ],
            out_specs=pl.BlockSpec((bm, Np), lambda i: (i, 0)),
        ),
        compiler_params=pltpu.CompilerParams(
            dimension_semantics=("parallel",),              # M shards across TCs
            vmem_limit_bytes=64 * 1024 * 1024),
    )(a_p, b_p, s_p, t_p)

    if (Mp, Np) != (M, N):
        out = out[:M, :N]
    return out


# ----------------------------------------------------------------------------
# im2col (pure data movement, bf16, fused by XLA inside the per-conv jit)
# ----------------------------------------------------------------------------
def _im2col(x, k, stride, pad):
    """x: (N,H,W,C) NHWC -> patches (N*Ho*Wo, k*k*C), tap order (dy, dx, c)."""
    N, H, W, C = x.shape
    if pad:
        x = jnp.pad(x, ((0, 0), (pad, pad), (pad, pad), (0, 0)))
    Ho = (H + 2 * pad - k) // stride + 1
    Wo = (W + 2 * pad - k) // stride + 1
    taps = []
    for dy in range(k):
        for dx in range(k):
            taps.append(lax.slice(
                x,
                (0, dy, dx, 0),
                (N, dy + (Ho - 1) * stride + 1, dx + (Wo - 1) * stride + 1, C),
                (1, stride, stride, 1)))
    patches = jnp.stack(taps, axis=3).reshape(N * Ho * Wo, k * k * C)
    return patches, Ho, Wo


# ----------------------------------------------------------------------------
# Conv + folded-BN [+ residual-of-input] [+ ReLU], NHWC, bf16 activations.
# jitted per unique (shape, k, stride, relu, residual) signature so identical
# layers share one compiled Pallas program.
# ----------------------------------------------------------------------------
@functools.partial(jax.jit,
                   static_argnames=("k", "stride", "pad", "relu",
                                    "add_input_residual"))
def conv_bn_act(x, w, conv_b, gamma, beta, mean, var, out_mult,
                *, k, stride, pad, relu, add_input_residual):
    N, H, W, Cin = x.shape
    Cout = w.shape[0]
    eps = 1e-5

    s = gamma * lax.rsqrt(var + eps)
    cb = jnp.zeros((Cout,), jnp.float32) if conv_b is None else conv_b
    bias = ((cb - mean) * s + beta) * out_mult
    scale = s * out_mult

    wmat = jnp.transpose(w, (2, 3, 1, 0)).reshape(k * k * Cin, Cout)

    if k == 1 and stride == 1 and pad == 0:
        patches, Ho, Wo = x.reshape(N * H * W, Cin), H, W
    else:
        patches, Ho, Wo = _im2col(x.astype(jnp.bfloat16), k, stride, pad)

    out = fused_matmul(patches, wmat, scale, bias,
                       relu=relu, add_a=add_input_residual)
    return out.reshape(N, Ho, Wo, Cout)


def _conv(x, w, conv_b, bn, *, k, stride, pad, relu,
          out_mult=1.0, add_input_residual=False):
    return conv_bn_act(x, w, conv_b, bn['gamma'], bn['beta'], bn['mean'],
                       bn['var'], out_mult, k=k, stride=stride, pad=pad,
                       relu=relu, add_input_residual=add_input_residual)


# ----------------------------------------------------------------------------
# ResNet-18 (as written) forward
# ----------------------------------------------------------------------------
def basic_block(x, p):
    s = p['stride']
    # left = conv3x3(s) -> BN -> ReLU -> conv3x3(s) -> BN
    y = _conv(x, p['w1'], p['b1'], p['bn1'], k=3, stride=s, pad=1, relu=True)
    if p['shortcut'] is None:
        # x = left(x); x += x; relu  ->  relu(2 * left(x)) via out_mult=2
        return _conv(y, p['w2'], p['b2'], p['bn2'], k=3, stride=s, pad=1,
                     relu=True, out_mult=2.0)
    y = _conv(y, p['w2'], p['b2'], p['bn2'], k=3, stride=s, pad=1, relu=False)
    sc = p['shortcut']
    # out = relu(y + BN(conv1x1(y)))  -- residual (== GEMM input) fused in-kernel
    return _conv(y, sc['w'], None, sc['bn'], k=1, stride=1, pad=0,
                 relu=True, add_input_residual=True)


def resnet_forward(params, x_nchw):
    # accept NCHW like PyTorch; compute in NHWC, bf16 activations.
    x = jnp.transpose(x_nchw, (0, 2, 3, 1)).astype(jnp.bfloat16)
    x = _conv(x, params['stem']['w'], None, params['stem']['bn'],
              k=3, stride=1, pad=1, relu=True)
    for name in ('layer1', 'layer2', 'layer3', 'layer4'):
        for blk in params[name]:
            x = basic_block(x, blk)
    # F.avg_pool2d(x, 4)  (kernel=stride=4, no padding), in f32
    N, H, W, C = x.shape
    Hp, Wp = H // 4, W // 4
    pooled = (x[:, :Hp * 4, :Wp * 4, :].astype(jnp.float32)
              .reshape(N, Hp, 4, Wp, 4, C).mean(axis=(2, 4)))
    # x.view(N, -1) on NCHW ordering
    flat = jnp.transpose(pooled, (0, 3, 1, 2)).reshape(N, -1)
    # fc(512 -> num_classes): tiny (2x10-class), plain XLA dot (no Pallas pad waste)
    logits = flat @ params['fc']['w'].T.astype(jnp.float32) + params['fc']['b']
    return logits


# ----------------------------------------------------------------------------
# Deterministic parameter construction (synthetic; shapes from __init__)
# ----------------------------------------------------------------------------
def make_resnet18_params(key, num_classes=10):
    keys = iter(jax.random.split(key, 256))
    nxt = lambda: next(keys)

    def conv_w(cout, cin, k):
        std = (2.0 / (cin * k * k)) ** 0.5
        return std * jax.random.normal(nxt(), (cout, cin, k, k), jnp.float32)

    def conv_b(cout):
        return 0.01 * jax.random.normal(nxt(), (cout,), jnp.float32)

    def bn_p(c):
        return dict(
            gamma=jax.random.uniform(nxt(), (c,), jnp.float32, 0.5, 1.5),
            beta=0.1 * jax.random.normal(nxt(), (c,), jnp.float32),
            mean=0.1 * jax.random.normal(nxt(), (c,), jnp.float32),
            var=jax.random.uniform(nxt(), (c,), jnp.float32, 0.5, 1.5),
        )

    params = {'stem': dict(w=conv_w(64, 3, 3), bn=bn_p(64))}
    inchannel = 64

    def make_layer(channels, num_blocks, stride):
        nonlocal inchannel
        blocks = []
        for s in [stride] + [1] * (num_blocks - 1):
            blk = dict(
                w1=conv_w(channels, inchannel, 3), b1=conv_b(channels), bn1=bn_p(channels),
                w2=conv_w(channels, channels, 3), b2=conv_b(channels), bn2=bn_p(channels),
                stride=s,
            )
            if s != 1 or inchannel != channels:
                blk['shortcut'] = dict(w=conv_w(channels, channels, 1), bn=bn_p(channels))
            else:
                blk['shortcut'] = None
            blocks.append(blk)
            inchannel = channels
        return blocks

    params['layer1'] = make_layer(64, 2, 1)
    params['layer2'] = make_layer(128, 2, 2)
    params['layer3'] = make_layer(256, 2, 2)
    params['layer4'] = make_layer(512, 2, 2)
    params['fc'] = dict(
        w=(1.0 / 512 ** 0.5) * jax.random.normal(nxt(), (num_classes, 512), jnp.float32),
        b=0.01 * jax.random.normal(nxt(), (num_classes,), jnp.float32),
    )
    return params


if __name__ == "__main__":
    key = jax.random.PRNGKey(0)
    pkey, xkey = jax.random.split(key)
    params = make_resnet18_params(pkey)

    # The as-written forward (stride applied to both convs of each strided
    # block, then avg_pool2d(.,4) and fc(512)) needs layer4 output spatial in
    # [4, 7], i.e. input >= 193 px.  Smallest canonical size 224x224; batch=1
    # keeps the single-pass demo cheap (~290 grid steps, ~14 unique kernels).
    x = jax.random.normal(xkey, (1, 3, 224, 224), jnp.float32)

    logits = resnet_forward(params, x)
    logits = jax.block_until_ready(logits)

    assert logits.shape == (1, 10), logits.shape
    assert bool(jnp.all(jnp.isfinite(logits)))
    print("KERNEL_OK")
</pallas_src>

<mosaic_0001>
module attributes {stable_mosaic.version = 11 : i64} {
  func.func @_gemm_kernel(%arg0: i32, %arg1: memref<1024x32xbf16, #tpu.memory_space<vmem>>, %arg2: memref<32x128xbf16, #tpu.memory_space<vmem>>, %arg3: memref<1x128xf32, #tpu.memory_space<vmem>>, %arg4: memref<1x128xf32, #tpu.memory_space<vmem>>, %arg5: memref<1024x128xbf16, #tpu.memory_space<vmem>>) attributes {dimension_semantics = [#tpu.dimension_semantics<parallel>], iteration_bounds = array<i64: 49>, scalar_prefetch = 0 : i64, scratch_operands = 0 : i64, tpu.core_type = #tpu.core_type<tc>, window_params = [{transform_indices = @transform_0, window_bounds = array<i64: 1024, 32>}, {pipeline_mode = #tpu.pipeline_mode<synchronous>, transform_indices = @transform_1, window_bounds = array<i64: 32, 128>}, {pipeline_mode = #tpu.pipeline_mode<synchronous>, transform_indices = @transform_2, window_bounds = array<i64: 1, 128>}, {pipeline_mode = #tpu.pipeline_mode<synchronous>, transform_indices = @transform_3, window_bounds = array<i64: 1, 128>}, {transform_indices = @transform_4, window_bounds = array<i64: 1024, 128>}]} {
    %c0 = arith.constant 0 : index
    %c0_0 = arith.constant 0 : index
    %0 = vector.load %arg1[%c0, %c0_0] : memref<1024x32xbf16, #tpu.memory_space<vmem>>, vector<1024x32xbf16>
    %c0_1 = arith.constant 0 : index
    %c0_2 = arith.constant 0 : index
    %1 = vector.load %arg2[%c0_1, %c0_2] : memref<32x128xbf16, #tpu.memory_space<vmem>>, vector<32x128xbf16>
    %cst = arith.constant dense<0.000000e+00> : vector<1024x128xf32>
    %2 = tpu.matmul %0, %1, %cst {dimension_numbers = #tpu.dot_dimension_numbers<[1], [0], [0], [1], [0, 0, 1, 1], [], []>} : vector<1024x32xbf16>, vector<32x128xbf16>, vector<1024x128xf32> -> vector<1024x128xf32>
    %c0_3 = arith.constant 0 : index
    %c0_4 = arith.constant 0 : index
    %3 = vector.load %arg3[%c0_3, %c0_4] : memref<1x128xf32, #tpu.memory_space<vmem>>, vector<1x128xf32>
    %4 = vector.broadcast %3 : vector<1x128xf32> to vector<1024x128xf32>
    %5 = arith.mulf %2, %4 : vector<1024x128xf32>
    %c0_5 = arith.constant 0 : index
    %c0_6 = arith.constant 0 : index
    %6 = vector.load %arg4[%c0_5, %c0_6] : memref<1x128xf32, #tpu.memory_space<vmem>>, vector<1x128xf32>
    %7 = vector.broadcast %6 : vector<1x128xf32> to vector<1024x128xf32>
    %8 = arith.addf %5, %7 : vector<1024x128xf32>
    %cst_7 = arith.constant 0.000000e+00 : f32
    %9 = vector.broadcast %cst_7 : f32 to vector<1024x128xf32>
    %10 = arith.maximumf %8, %9 : vector<1024x128xf32>
    %11 = arith.truncf %10 : vector<1024x128xf32> to vector<1024x128xbf16>
    %c0_8 = arith.constant 0 : index
    %c0_9 = arith.constant 0 : index
    %12 = vector.load %arg5[%c0_8, %c0_9] : memref<1024x128xbf16, #tpu.memory_space<vmem>>, vector<1024x128xbf16>
    tpu.vector_store %arg5[%c0_8, %c0_9], %11 {strides = array<i32>} : memref<1024x128xbf16, #tpu.memory_space<vmem>>, vector<1024x128xbf16>,
    return
  }
  func.func @transform_0(%arg0: i32) -> (i32, i32) {
    %c0_i32 = arith.constant 0 : i32
    %c0_i32_0 = arith.constant 0 : i32
    return %arg0, %c0_i32 : i32, i32
  }
  func.func @transform_1(%arg0: i32) -> (i32, i32) {
    %c0_i32 = arith.constant 0 : i32
    %c0_i32_0 = arith.constant 0 : i32
    %c0_i32_1 = arith.constant 0 : i32
    return %c0_i32, %c0_i32_0 : i32, i32
  }
  func.func @transform_2(%arg0: i32) -> (i32, i32) {
    %c0_i32 = arith.constant 0 : i32
    %c0_i32_0 = arith.constant 0 : i32
    %c0_i32_1 = arith.constant 0 : i32
    return %c0_i32, %c0_i32_0 : i32, i32
  }
  func.func @transform_3(%arg0: i32) -> (i32, i32) {
    %c0_i32 = arith.constant 0 : i32
    %c0_i32_0 = arith.constant 0 : i32
    %c0_i32_1 = arith.constant 0 : i32
    return %c0_i32, %c0_i32_0 : i32, i32
  }
  func.func @transform_4(%arg0: i32) -> (i32, i32) {
    %c0_i32 = arith.constant 0 : i32
    %c0_i32_0 = arith.constant 0 : i32
    return %arg0, %c0_i32 : i32, i32
  }
}

</mosaic_0001>

<llo_original>
// kernel: conv_bn_act.1
$region0: #{conv_bn_act.1}
  #allocation0 [shape = 'u32[]', space=smem, size = 0x4, offset = 0x4, fixed_abs, tag = 'smem constant byte address 0x4 - core index']
  #allocation1 [shape = 'u32[144,128]{1,0:T(1,128)}', space=vmem, size = 0x12000, scoped, tag = 'internal scratch']
  %s0 = inlined_call_operand.vmem [shape: bf16[50176,32], index: 0, kind: input, shape index: {}]
  %s1 = inlined_call_operand.vmem [shape: bf16[32,128], index: 1, kind: input, shape index: {}]
  %s2 = inlined_call_operand.vmem [shape: f32[1,128], index: 2, kind: input, shape index: {}]
  %s3 = inlined_call_operand.vmem [shape: f32[1,128], index: 3, kind: input, shape index: {}]
  %s4 = inlined_call_operand.vmem [shape: bf16[50176,128], index: 4, kind: output, shape index: {}]
  %s5 = sld [smem:[#allocation0]]
  $region49: #{conv_bn_act.1} parent=0
    _
  %s7 = ssub.s32 1, %s5
  %s8 = scalar_select 0, %s7, %s5
  loop: start=0, step=1, limit=51
  $region2: #{conv_bn_act.1} parent=0 // loop_pre_header
    _
  $region3: #{conv_bn_act.1} parent=0 // loop_header
    %s10 = sphi 0, %s14
    %p11 = scmp.ge.s32.totalorder %s10, 51
    %s20 = sphi 0, %s22
    %s23 = sphi 0, %s20
    %s24 = sphi 0, %s23
    %s40 = sphi 0, %s24
    %s44 = sphi 0, %s44
    %s46 = sphi 0, %s44
    %s47 = sphi 0, %s46
    %s61 = sphi 0, %s47
    %s65 = sphi 0, %s65
    %s67 = sphi 0, %s65
    %s68 = sphi 0, %s67
    %s82 = sphi 0, %s68
    %s86 = sphi 0, %s86
    %s88 = sphi 0, %s86
    %s89 = sphi 0, %s88
    %s103 = sphi 0, %s89
    %s109 = sphi 0, %s111
    %s112 = sphi 0, %s109
    %s113 = sphi 0, %s112
    %s129 = sphi 0, %s113
  $region4: #{conv_bn_act.1} parent=0 // loop_header_branch
    %13 = sbr.rel (%p11) target = $region8
  $region5: #{conv_bn_act.1} parent=0 // loop_body
    %s15 = ssub.s32 %s10, 1
    %s16 = ssub.s32 %s10, 2
    %s17 = sadd.s32 %s10, 1
    %s18 = ssub.s32 %s10, %s17
    %p19 = scmp.eq.s32.totalorder %s18, 0
    %s21 = sadd.s32 %s20, 1
    %s22 = scalar_select %p19, %s20, %s21
    %p25 = pneg %p19
    %p26 = scmp.eq.s32.totalorder %s10, 48
    %p27 = por %p25, %p26
    %p28 = scmp.ne.s32.totalorder %s20, %s23
    %p29 = scmp.eq.s32.totalorder %s10, 0
    %p30 = por %p28, %p29
    %p31 = scmp.ne.s32.totalorder %s20, %s23
    %p32 = scmp.eq.s32.totalorder %s15, 48
    %p33 = por %p31, %p32
    %p34 = scmp.ne.s32.totalorder %s23, %s24
    %p35 = scmp.eq.s32.totalorder %s15, 0
    %p36 = por %p34, %p35
    %p37 = scmp.ne.s32.totalorder %s23, %s24
    %p38 = scmp.eq.s32.totalorder %s16, 48
    %p39 = por %p37, %p38
    %p41 = scmp.ne.s32.totalorder %s24, %s40
    %p42 = scmp.eq.s32.totalorder %s16, 0
    %p43 = por %p41, %p42
    %s45 = sadd.s32 %s44, 1
    %p48 = scmp.eq.s32.totalorder %s10, 48
    %p49 = scmp.ne.s32.totalorder %s44, %s46
    %p50 = scmp.eq.s32.totalorder %s10, 0
    %p51 = por %p49, %p50
    %p52 = scmp.ne.s32.totalorder %s44, %s46
    %p53 = scmp.eq.s32.totalorder %s15, 48
    %p54 = por %p52, %p53
    %p55 = scmp.ne.s32.totalorder %s46, %s47
    %p56 = scmp.eq.s32.totalorder %s15, 0
    %p57 = por %p55, %p56
    %p58 = scmp.ne.s32.totalorder %s46, %s47
    %p59 = scmp.eq.s32.totalorder %s16, 48
    %p60 = por %p58, %p59
    %p62 = scmp.ne.s32.totalorder %s47, %s61
    %p63 = scmp.eq.s32.totalorder %s16, 0
    %p64 = por %p62, %p63
    %s66 = sadd.s32 %s65, 1
    %p69 = scmp.eq.s32.totalorder %s10, 48
    %p70 = scmp.ne.s32.totalorder %s65, %s67
    %p71 = scmp.eq.s32.totalorder %s10, 0
    %p72 = por %p70, %p71
    %p73 = scmp.ne.s32.totalorder %s65, %s67
    %p74 = scmp.eq.s32.totalorder %s15, 48
    %p75 = por %p73, %p74
    %p76 = scmp.ne.s32.totalorder %s67, %s68
    %p77 = scmp.eq.s32.totalorder %s15, 0
    %p78 = por %p76, %p77
    %p79 = scmp.ne.s32.totalorder %s67, %s68
    %p80 = scmp.eq.s32.totalorder %s16, 48
    %p81 = por %p79, %p80
    %p83 = scmp.ne.s32.totalorder %s68, %s82
    %p84 = scmp.eq.s32.totalorder %s16, 0
    %p85 = por %p83, %p84
    %s87 = sadd.s32 %s86, 1
    %p90 = scmp.eq.s32.totalorder %s10, 48
    %p91 = scmp.ne.s32.totalorder %s86, %s88
    %p92 = scmp.eq.s32.totalorder %s10, 0
    %p93 = por %p91, %p92
    %p94 = scmp.ne.s32.totalorder %s86, %s88
    %p95 = scmp.eq.s32.totalorder %s15, 48
    %p96 = por %p94, %p95
    %p97 = scmp.ne.s32.totalorder %s88, %s89
    %p98 = scmp.eq.s32.totalorder %s15, 0
    %p99 = por %p97, %p98
    %p100 = scmp.ne.s32.totalorder %s88, %s89
    %p101 = scmp.eq.s32.totalorder %s16, 48
    %p102 = por %p100, %p101
    %p104 = scmp.ne.s32.totalorder %s89, %s103
    %p105 = scmp.eq.s32.totalorder %s16, 0
    %p106 = por %p104, %p105
    %s107 = ssub.s32 %s10, %s17
    %p108 = scmp.eq.s32.totalorder %s107, 0
    %s110 = sadd.s32 %s109, 1
    %s111 = scalar_select %p108, %s109, %s110
    %p114 = pneg %p108
    %p115 = scmp.eq.s32.totalorder %s10, 48
    %p116 = por %p114, %p115
    %p117 = scmp.ne.s32.totalorder %s109, %s112
    %p118 = scmp.eq.s32.totalorder %s10, 0
    %p119 = por %p117, %p118
    %p120 = scmp.ne.s32.totalorder %s109, %s112
    %p121 = scmp.eq.s32.totalorder %s15, 48
    %p122 = por %p120, %p121
    %p123 = scmp.ne.s32.totalorder %s112, %s113
    %p124 = scmp.eq.s32.totalorder %s15, 0
    %p125 = por %p123, %p124
    %p126 = scmp.ne.s32.totalorder %s112, %s113
    %p127 = scmp.eq.s32.totalorder %s16, 48
    %p128 = por %p126, %p127
    %p130 = scmp.ne.s32.totalorder %s113, %s129
    %p131 = scmp.eq.s32.totalorder %s16, 0
    %p132 = por %p130, %p131
    %p133 = scmp.le.s32.totalorder 1, %s10
    %p134 = scmp.lt.s32.totalorder %s10, 50
    %p135 = pnand %p133, %p134
    %p136 = pneg %p135
    // Predicated region
    $region9: #{conv_bn_act.1} parent=5 // pred_check
      _
    $region10: #{conv_bn_act.1} parent=5 // pred_check_branch
      %138 = sbr.rel (%p135) target = $region12
    $region11: #{conv_bn_act.1} parent=5 // pred_region
      %s139 = ssub.s32 %s10, 1
      // Predicated region
      $region13: #{conv_bn_act.1} parent=11 // pred_check
        %p140 = pneg %p57
      $region14: #{conv_bn_act.1} parent=11 // pred_check_branch
        %142 = sbr.rel (%p140) target = $region16
      $region15: #{conv_bn_act.1} parent=11 // pred_region
        _
      $region16: #{conv_bn_act.1} parent=11 // pred_fallthru
        _
      // Predicated region
      $region17: #{conv_bn_act.1} parent=11 // pred_check
        %p143 = pneg %p78
      $region18: #{conv_bn_act.1} parent=11 // pred_check_branch
        %145 = sbr.rel (%p143) target = $region20
      $region19: #{conv_bn_act.1} parent=11 // pred_region
        _
      $region20: #{conv_bn_act.1} parent=11 // pred_fallthru
        _
      // Predicated region
      $region21: #{conv_bn_act.1} parent=11 // pred_check
        %p146 = pneg %p99
      $region22: #{conv_bn_act.1} parent=11 // pred_check_branch
        %148 = sbr.rel (%p146) target = $region24
      $region23: #{conv_bn_act.1} parent=11 // pred_region
        _
      $region24: #{conv_bn_act.1} parent=11 // pred_fallthru
        _
    $region12: #{conv_bn_act.1} parent=5 // pred_fallthru
      _
    %p149 = scmp.lt.s32.totalorder %s10, 49
    // Predicated region
    $region25: #{conv_bn_act.1} parent=5 // pred_check
      %p150 = pneg %p149
    $region26: #{conv_bn_act.1} parent=5 // pred_check_branch
      %152 = sbr.rel (%p150) target = $region28
    $region27: #{conv_bn_act.1} parent=5 // pred_region
      // Predicated region
      $region29: #{conv_bn_act.1} parent=27 // pred_check
        %p153 = pneg %p30
      $region30: #{conv_bn_act.1} parent=27 // pred_check_branch
        %155 = sbr.rel (%p153) target = $region32
      $region31: #{conv_bn_act.1} parent=27 // pred_region
        %s156 = smul.u32 128, %s10
        %p157 = scmp.lt.s32.totalorder %s156, 6271
        %s158 = scalar_select %p157, %s156, 6271
        %s159 = smul.addr %s158, 4
        %s160 = scalar_lea.vmem %s0, %s159
        %s161 = smul.u32 128, %s10
      $region32: #{conv_bn_act.1} parent=27 // pred_fallthru
        _
    $region28: #{conv_bn_act.1} parent=5 // pred_fallthru
      _
    %p162 = scmp.le.s32.totalorder 1, %s10
    %p163 = scmp.lt.s32.totalorder %s10, 50
    %p164 = pnand %p162, %p163
    %p165 = pneg %p164
    // Predicated region
    $region33: #{conv_bn_act.1} parent=5 // pred_check
      _
    $region34: #{conv_bn_act.1} parent=5 // pred_check_branch
      %167 = sbr.rel (%p164) target = $region36
    $region35: #{conv_bn_act.1} parent=5 // pred_region
      %s168 = ssub.s32 %s10, 1
      %s169 = smul.u32 128, %s15
      %p170 = scmp.lt.s32.totalorder %s169, 6271
      %s171 = scalar_select %p170, %s169, 6271
      %s172 = smul.addr %s171, 4
      %s173 = scalar_lea.vmem %s0, %s172
      %p174 = pneg %p36
      %p175 = pneg %p33
      %p176 = pneg %p57
      %p177 = pneg %p54
      %p178 = pneg %p78
      %p179 = pneg %p75
      %p180 = pneg %p99
      %p181 = pneg %p96
      %p182 = pneg %p125
      %p183 = pneg %p122
      %s184 = smul.u32 128, %s15
      %p185 = scmp.lt.s32.totalorder %s184, 6271
      %s186 = scalar_select %p185, %s184, 6271
      %s187 = smul.addr %s186, 4
      %s188 = scalar_lea.vmem %s4, %s187
      %s189 = smul.u32 128, %s15
      %p190 = scmp.lt.s32.totalorder %s189, 6271
      %s191 = scalar_select %p190, %s189, 6271
      %s192 = smul.addr %s191, 4
      %s193 = scalar_lea.vmem %s0, %s192
      %s194 = smul.u32 128, %s15
      %s195 = smul.u32 128, %s15
      %p196 = scmp.lt.s32.totalorder %s195, 6271
      %s197 = scalar_select %p196, %s195, 6271
      %s198 = smul.addr %s197, 4
      %s199 = scalar_lea.vmem %s4, %s198
      %s200 = smul.u32 128, %s15
      %v202 = vld [vmem:[%s193] sm:$0xf]
      %v203 = vld [vmem:[%s193 + $0x4] sm:$0xf]
      %v204 = vld [vmem:[%s193 + $0x8] sm:$0xf]
      %v205 = vld [vmem:[%s193 + $0xc] sm:$0xf]
      %v206 = vld [vmem:[%s193 + $0x10] sm:$0xf]
      %v207 = vld [vmem:[%s193 + $0x14] sm:$0xf]
      %v208 = vld [vmem:[%s193 + $0x18] sm:$0xf]
      %v209 = vld [vmem:[%s193 + $0x1c] sm:$0xf]
      %v210 = vld [vmem:[%s193 + $0x20] sm:$0xf]
      %v211 = vld [vmem:[%s193 + $0x24] sm:$0xf]
      %v212 = vld [vmem:[%s193 + $0x28] sm:$0xf]
      %v213 = vld [vmem:[%s193 + $0x2c] sm:$0xf]
      %v214 = vld [vmem:[%s193 + $0x30] sm:$0xf]
      %v215 = vld [vmem:[%s193 + $0x34] sm:$0xf]
      %v216 = vld [vmem:[%s193 + $0x38] sm:$0xf]
      %v217 = vld [vmem:[%s193 + $0x3c] sm:$0xf]
      %v218 = vld [vmem:[%s193 + $0x40] sm:$0xf]
      %v219 = vld [vmem:[%s193 + $0x44] sm:$0xf]
      %v220 = vld [vmem:[%s193 + $0x48] sm:$0xf]
      %v221 = vld [vmem:[%s193 + $0x4c] sm:$0xf]
      %v222 = vld [vmem:[%s193 + $0x50] sm:$0xf]
      %v223 = vld [vmem:[%s193 + $0x54] sm:$0xf]
      %v224 = vld [vmem:[%s193 + $0x58] sm:$0xf]
      %v225 = vld [vmem:[%s193 + $0x5c] sm:$0xf]
      %v226 = vld [vmem:[%s193 + $0x60] sm:$0xf]
      %v227 = vld [vmem:[%s193 + $0x64] sm:$0xf]
      %v228 = vld [vmem:[%s193 + $0x68] sm:$0xf]
      %v229 = vld [vmem:[%s193 + $0x6c] sm:$0xf]
      %v230 = vld [vmem:[%s193 + $0x70] sm:$0xf]
      %v231 = vld [vmem:[%s193 + $0x74] sm:$0xf]
      %v232 = vld [vmem:[%s193 + $0x78] sm:$0xf]
      %v233 = vld [vmem:[%s193 + $0x7c] sm:$0xf]
      %v234 = vld [vmem:[%s193 + $0x80] sm:$0xf]
      %v235 = vld [vmem:[%s193 + $0x84] sm:$0xf]
      %v236 = vld [vmem:[%s193 + $0x88] sm:$0xf]
      %v237 = vld [vmem:[%s193 + $0x8c] sm:$0xf]
      %v238 = vld [vmem:[%s193 + $0x90] sm:$0xf]
      %v239 = vld [vmem:[%s193 + $0x94] sm:$0xf]
      %v240 = vld [vmem:[%s193 + $0x98] sm:$0xf]
      %v241 = vld [vmem:[%s193 + $0x9c] sm:$0xf]
      %v242 = vld [vmem:[%s193 + $0xa0] sm:$0xf]
      %v243 = vld [vmem:[%s193 + $0xa4] sm:$0xf]
      %v244 = vld [vmem:[%s193 + $0xa8] sm:$0xf]
      %v245 = vld [vmem:[%s193 + $0xac] sm:$0xf]
      %v246 = vld [vmem:[%s193 + $0xb0] sm:$0xf]
      %v247 = vld [vmem:[%s193 + $0xb4] sm:$0xf]
      %v248 = vld [vmem:[%s193 + $0xb8] sm:$0xf]
      %v249 = vld [vmem:[%s193 + $0xbc] sm:$0xf]
      %v250 = vld [vmem:[%s193 + $0xc0] sm:$0xf]
      %v251 = vld [vmem:[%s193 + $0xc4] sm:$0xf]
      %v252 = vld [vmem:[%s193 + $0xc8] sm:$0xf]
      %v253 = vld [vmem:[%s193 + $0xcc] sm:$0xf]
      %v254 = vld [vmem:[%s193 + $0xd0] sm:$0xf]
      %v255 = vld [vmem:[%s193 + $0xd4] sm:$0xf]
      %v256 = vld [vmem:[%s193 + $0xd8] sm:$0xf]
      %v257 = vld [vmem:[%s193 + $0xdc] sm:$0xf]
      %v258 = vld [vmem:[%s193 + $0xe0] sm:$0xf]
      %v259 = vld [vmem:[%s193 + $0xe4] sm:$0xf]
      %v260 = vld [vmem:[%s193 + $0xe8] sm:$0xf]
      %v261 = vld [vmem:[%s193 + $0xec] sm:$0xf]
      %v262 = vld [vmem:[%s193 + $0xf0] sm:$0xf]
      %v263 = vld [vmem:[%s193 + $0xf4] sm:$0xf]
      %v264 = vld [vmem:[%s193 + $0xf8] sm:$0xf]
      %v265 = vld [vmem:[%s193 + $0xfc] sm:$0xf]
      %v266 = vld [vmem:[%s193 + $0x100] sm:$0xf]
      %v267 = vld [vmem:[%s193 + $0x104] sm:$0xf]
      %v268 = vld [vmem:[%s193 + $0x108] sm:$0xf]
      %v269 = vld [vmem:[%s193 + $0x10c] sm:$0xf]
      %v270 = vld [vmem:[%s193 + $0x110] sm:$0xf]
      %v271 = vld [vmem:[%s193 + $0x114] sm:$0xf]
      %v272 = vld [vmem:[%s193 + $0x118] sm:$0xf]
      %v273 = vld [vmem:[%s193 + $0x11c] sm:$0xf]
      %v274 = vld [vmem:[%s193 + $0x120] sm:$0xf]
      %v275 = vld [vmem:[%s193 + $0x124] sm:$0xf]
      %v276 = vld [vmem:[%s193 + $0x128] sm:$0xf]
      %v277 = vld [vmem:[%s193 + $0x12c] sm:$0xf]
      %v278 = vld [vmem:[%s193 + $0x130] sm:$0xf]
      %v279 = vld [vmem:[%s193 + $0x134] sm:$0xf]
      %v280 = vld [vmem:[%s193 + $0x138] sm:$0xf]
      %v281 = vld [vmem:[%s193 + $0x13c] sm:$0xf]
      %v282 = vld [vmem:[%s193 + $0x140] sm:$0xf]
      %v283 = vld [vmem:[%s193 + $0x144] sm:$0xf]
      %v284 = vld [vmem:[%s193 + $0x148] sm:$0xf]
      %v285 = vld [vmem:[%s193 + $0x14c] sm:$0xf]
      %v286 = vld [vmem:[%s193 + $0x150] sm:$0xf]
      %v287 = vld [vmem:[%s193 + $0x154] sm:$0xf]
      %v288 = vld [vmem:[%s193 + $0x158] sm:$0xf]
      %v289 = vld [vmem:[%s193 + $0x15c] sm:$0xf]
      %v290 = vld [vmem:[%s193 + $0x160] sm:$0xf]
      %v291 = vld [vmem:[%s193 + $0x164] sm:$0xf]
      %v292 = vld [vmem:[%s193 + $0x168] sm:$0xf]
      %v293 = vld [vmem:[%s193 + $0x16c] sm:$0xf]
      %v294 = vld [vmem:[%s193 + $0x170] sm:$0xf]
      %v295 = vld [vmem:[%s193 + $0x174] sm:$0xf]
      %v296 = vld [vmem:[%s193 + $0x178] sm:$0xf]
      %v297 = vld [vmem:[%s193 + $0x17c] sm:$0xf]
      %v298 = vld [vmem:[%s193 + $0x180] sm:$0xf]
      %v299 = vld [vmem:[%s193 + $0x184] sm:$0xf]
      %v300 = vld [vmem:[%s193 + $0x188] sm:$0xf]
      %v301 = vld [vmem:[%s193 + $0x18c] sm:$0xf]
      %v302 = vld [vmem:[%s193 + $0x190] sm:$0xf]
      %v303 = vld [vmem:[%s193 + $0x194] sm:$0xf]
      %v304 = vld [vmem:[%s193 + $0x198] sm:$0xf]
      %v305 = vld [vmem:[%s193 + $0x19c] sm:$0xf]
      %v306 = vld [vmem:[%s193 + $0x1a0] sm:$0xf]
      %v307 = vld [vmem:[%s193 + $0x1a4] sm:$0xf]
      %v308 = vld [vmem:[%s193 + $0x1a8] sm:$0xf]
      %v309 = vld [vmem:[%s193 + $0x1ac] sm:$0xf]
      %v310 = vld [vmem:[%s193 + $0x1b0] sm:$0xf]
      %v311 = vld [vmem:[%s193 + $0x1b4] sm:$0xf]
      %v312 = vld [vmem:[%s193 + $0x1b8] sm:$0xf]
      %v313 = vld [vmem:[%s193 + $0x1bc] sm:$0xf]
      %v314 = vld [vmem:[%s193 + $0x1c0] sm:$0xf]
      %v315 = vld [vmem:[%s193 + $0x1c4] sm:$0xf]
      %v316 = vld [vmem:[%s193 + $0x1c8] sm:$0xf]
      %v317 = vld [vmem:[%s193 + $0x1cc] sm:$0xf]
      %v318 = vld [vmem:[%s193 + $0x1d0] sm:$0xf]
      %v319 = vld [vmem:[%s193 + $0x1d4] sm:$0xf]
      %v320 = vld [vmem:[%s193 + $0x1d8] sm:$0xf]
      %v321 = vld [vmem:[%s193 + $0x1dc] sm:$0xf]
      %v322 = vld [vmem:[%s193 + $0x1e0] sm:$0xf]
      %v323 = vld [vmem:[%s193 + $0x1e4] sm:$0xf]
      %v324 = vld [vmem:[%s193 + $0x1e8] sm:$0xf]
      %v325 = vld [vmem:[%s193 + $0x1ec] sm:$0xf]
      %v326 = vld [vmem:[%s193 + $0x1f0] sm:$0xf]
      %v327 = vld [vmem:[%s193 + $0x1f4] sm:$0xf]
      %v328 = vld [vmem:[%s193 + $0x1f8] sm:$0xf]
      %v329 = vld [vmem:[%s193 + $0x1fc] sm:$0xf]
      %v330 = vld [vmem:[%s1] sm:$0xf]
      %v331 = vld [vmem:[%s1 + $0x4] sm:$0xf]
      %v332 = vld [vmem:[%s1 + $0x8] sm:$0xf]
      %v333 = vld [vmem:[%s1 + $0xc] sm:$0xf]
      %v462 = vunpack.c.l.b16 %v202
      %v463 = vunpack.c.l.b16 %v203
      %v464 = vunpack.c.l.b16 %v204
      %v465 = vunpack.c.l.b16 %v205
      %v466 = vunpack.c.l.b16 %v206
      %v467 = vunpack.c.l.b16 %v207
      %v468 = vunpack.c.l.b16 %v208
      %v469 = vunpack.c.l.b16 %v209
      %v470 = vunpack.c.l.b16 %v210
      %v471 = vunpack.c.l.b16 %v211
      %v472 = vunpack.c.l.b16 %v212
      %v473 = vunpack.c.l.b16 %v213
      %v474 = vunpack.c.l.b16 %v214
      %v475 = vunpack.c.l.b16 %v215
      %v476 = vunpack.c.l.b16 %v216
      %v477 = vunpack.c.l.b16 %v217
      %v478 = vunpack.c.l.b16 %v218
      %v479 = vunpack.c.l.b16 %v219
      %v480 = vunpack.c.l.b16 %v220
      %v481 = vunpack.c.l.b16 %v221
      %v482 = vunpack.c.l.b16 %v222
      %v483 = vunpack.c.l.b16 %v223
      %v484 = vunpack.c.l.b16 %v224
      %v485 = vunpack.c.l.b16 %v225
      %v486 = vunpack.c.l.b16 %v226
      %v487 = vunpack.c.l.b16 %v227
      %v488 = vunpack.c.l.b16 %v228
      %v489 = vunpack.c.l.b16 %v229
      %v490 = vunpack.c.l.b16 %v230
      %v491 = vunpack.c.l.b16 %v231
      %v492 = vunpack.c.l.b16 %v232
      %v493 = vunpack.c.l.b16 %v233
      %v494 = vunpack.c.l.b16 %v234
      %v495 = vunpack.c.l.b16 %v235
      %v496 = vunpack.c.l.b16 %v236
      %v497 = vunpack.c.l.b16 %v237
      %v498 = vunpack.c.l.b16 %v238
      %v499 = vunpack.c.l.b16 %v239
      %v500 = vunpack.c.l.b16 %v240
      %v501 = vunpack.c.l.b16 %v241
      %v502 = vunpack.c.l.b16 %v242
      %v503 = vunpack.c.l.b16 %v243
      %v504 = vunpack.c.l.b16 %v244
      %v505 = vunpack.c.l.b16 %v245
      %v506 = vunpack.c.l.b16 %v246
      %v507 = vunpack.c.l.b16 %v247
      %v508 = vunpack.c.l.b16 %v248
      %v509 = vunpack.c.l.b16 %v249
      %v510 = vunpack.c.l.b16 %v250
      %v511 = vunpack.c.l.b16 %v251
      %v512 = vunpack.c.l.b16 %v252
      %v513 = vunpack.c.l.b16 %v253
      %v514 = vunpack.c.l.b16 %v254
      %v515 = vunpack.c.l.b16 %v255
      %v516 = vunpack.c.l.b16 %v256
      %v517 = vunpack.c.l.b16 %v257
      %v518 = vunpack.c.l.b16 %v258
      %v519 = vunpack.c.l.b16 %v259
      %v520 = vunpack.c.l.b16 %v260
      %v521 = vunpack.c.l.b16 %v261
      %v522 = vunpack.c.l.b16 %v262
      %v523 = vunpack.c.l.b16 %v263
      %v524 = vunpack.c.l.b16 %v264
      %v525 = vunpack.c.l.b16 %v265
      %v526 = vunpack.c.l.b16 %v266
      %v527 = vunpack.c.l.b16 %v267
      %v528 = vunpack.c.l.b16 %v268
      %v529 = vunpack.c.l.b16 %v269
      %v530 = vunpack.c.l.b16 %v270
      %v531 = vunpack.c.l.b16 %v271
      %v532 = vunpack.c.l.b16 %v272
      %v533 = vunpack.c.l.b16 %v273
      %v534 = vunpack.c.l.b16 %v274
      %v535 = vunpack.c.l.b16 %v275
      %v536 = vunpack.c.l.b16 %v276
      %v537 = vunpack.c.l.b16 %v277
      %v538 = vunpack.c.l.b16 %v278
      %v539 = vunpack.c.l.b16 %v279
      %v540 = vunpack.c.l.b16 %v280
      %v541 = vunpack.c.l.b16 %v281
      %v542 = vunpack.c.l.b16 %v282
      %v543 = vunpack.c.l.b16 %v283
      %v544 = vunpack.c.l.b16 %v284
      %v545 = vunpack.c.l.b16 %v285
      %v546 = vunpack.c.l.b16 %v286
      %v547 = vunpack.c.l.b16 %v287
      %v548 = vunpack.c.l.b16 %v288
      %v549 = vunpack.c.l.b16 %v289
      %v550 = vunpack.c.l.b16 %v290
      %v551 = vunpack.c.l.b16 %v291
      %v552 = vunpack.c.l.b16 %v292
      %v553 = vunpack.c.l.b16 %v293
      %v554 = vunpack.c.l.b16 %v294
      %v555 = vunpack.c.l.b16 %v295
      %v556 = vunpack.c.l.b16 %v296
      %v557 = vunpack.c.l.b16 %v297
      %v558 = vunpack.c.l.b16 %v298
      %v559 = vunpack.c.l.b16 %v299
      %v560 = vunpack.c.l.b16 %v300
      %v561 = vunpack.c.l.b16 %v301
      %v562 = vunpack.c.l.b16 %v302
      %v563 = vunpack.c.l.b16 %v303
      %v564 = vunpack.c.l.b16 %v304
      %v565 = vunpack.c.l.b16 %v305
      %v566 = vunpack.c.l.b16 %v306
      %v567 = vunpack.c.l.b16 %v307
      %v568 = vunpack.c.l.b16 %v308
      %v569 = vunpack.c.l.b16 %v309
      %v570 = vunpack.c.l.b16 %v310
      %v571 = vunpack.c.l.b16 %v311
      %v572 = vunpack.c.l.b16 %v312
      %v573 = vunpack.c.l.b16 %v313
      %v574 = vunpack.c.l.b16 %v314
      %v575 = vunpack.c.l.b16 %v315
      %v576 = vunpack.c.l.b16 %v316
      %v577 = vunpack.c.l.b16 %v317
      %v578 = vunpack.c.l.b16 %v318
      %v579 = vunpack.c.l.b16 %v319
      %v580 = vunpack.c.l.b16 %v320
      %v581 = vunpack.c.l.b16 %v321
      %v582 = vunpack.c.l.b16 %v322
      %v583 = vunpack.c.l.b16 %v323
      %v584 = vunpack.c.l.b16 %v324
      %v585 = vunpack.c.l.b16 %v325
      %v586 = vunpack.c.l.b16 %v326
      %v587 = vunpack.c.l.b16 %v327
      %v588 = vunpack.c.l.b16 %v328
      %v589 = vunpack.c.l.b16 %v329
      %v590 = vpack.c.b16 %v463, %v462
      %v591 = vpack.c.b16 %v465, %v464
      %v592 = vpack.c.b16 %v467, %v466
      %v593 = vpack.c.b16 %v469, %v468
      %v594 = vpack.c.b16 %v471, %v470
      %v595 = vpack.c.b16 %v473, %v472
      %v596 = vpack.c.b16 %v475, %v474
      %v597 = vpack.c.b16 %v477, %v476
      %v598 = vpack.c.b16 %v479, %v478
      %v599 = vpack.c.b16 %v481, %v480
      %v600 = vpack.c.b16 %v483, %v482
      %v601 = vpack.c.b16 %v485, %v484
      %v602 = vpack.c.b16 %v487, %v486
      %v603 = vpack.c.b16 %v489, %v488
      %v604 = vpack.c.b16 %v491, %v490
      %v605 = vpack.c.b16 %v493, %v492
      %v606 = vpack.c.b16 %v495, %v494
      %v607 = vpack.c.b16 %v497, %v496
      %v608 = vpack.c.b16 %v499, %v498
      %v609 = vpack.c.b16 %v501, %v500
      %v610 = vpack.c.b16 %v503, %v502
      %v611 = vpack.c.b16 %v505, %v504
      %v612 = vpack.c.b16 %v507, %v506
      %v613 = vpack.c.b16 %v509, %v508
      %v614 = vpack.c.b16 %v511, %v510
      %v615 = vpack.c.b16 %v513, %v512
      %v616 = vpack.c.b16 %v515, %v514
      %v617 = vpack.c.b16 %v517, %v516
      %v618 = vpack.c.b16 %v519, %v518
      %v619 = vpack.c.b16 %v521, %v520
      %v620 = vpack.c.b16 %v523, %v522
      %v621 = vpack.c.b16 %v525, %v524
      %v622 = vpack.c.b16 %v527, %v526
      %v623 = vpack.c.b16 %v529, %v528
      %v624 = vpack.c.b16 %v531, %v530
      %v625 = vpack.c.b16 %v533, %v532
      %v626 = vpack.c.b16 %v535, %v534
      %v627 = vpack.c.b16 %v537, %v536
      %v628 = vpack.c.b16 %v539, %v538
      %v629 = vpack.c.b16 %v541, %v540
      %v630 = vpack.c.b16 %v543, %v542
      %v631 = vpack.c.b16 %v545, %v544
      %v632 = vpack.c.b16 %v547, %v546
      %v633 = vpack.c.b16 %v549, %v548
      %v634 = vpack.c.b16 %v551, %v550
      %v635 = vpack.c.b16 %v553, %v552
      %v636 = vpack.c.b16 %v555, %v554
      %v637 = vpack.c.b16 %v557, %v556
      %v638 = vpack.c.b16 %v559, %v558
      %v639 = vpack.c.b16 %v561, %v560
      %v640 = vpack.c.b16 %v563, %v562
      %v641 = vpack.c.b16 %v565, %v564
      %v642 = vpack.c.b16 %v567, %v566
      %v643 = vpack.c.b16 %v569, %v568
      %v644 = vpack.c.b16 %v571, %v570
      %v645 = vpack.c.b16 %v573, %v572
      %v646 = vpack.c.b16 %v575, %v574
      %v647 = vpack.c.b16 %v577, %v576
      %v648 = vpack.c.b16 %v579, %v578
      %v649 = vpack.c.b16 %v581, %v580
      %v650 = vpack.c.b16 %v583, %v582
      %v651 = vpack.c.b16 %v585, %v584
      %v652 = vpack.c.b16 %v587, %v586
      %v653 = vpack.c.b16 %v589, %v588
      %v658 = vunpack.c.l.b16 %v330
      %v659 = vunpack.c.l.b16 %v331
      %v660 = vunpack.c.l.b16 %v332
      %v661 = vunpack.c.l.b16 %v333
      %v662 = vpack.c.b16 %v659, %v658
      %v663 = vpack.c.b16 %v661, %v660
      %vm666 = vcmask 261120
      %v668 = vsel %vm666, %v590, 0
      %v671 = vsel %vm666, %v591, 0
      %v674 = vsel %vm666, %v592, 0
      %v677 = vsel %vm666, %v593, 0
      %v680 = vsel %vm666, %v594, 0
      %v683 = vsel %vm666, %v595, 0
      %v686 = vsel %vm666, %v596, 0
      %v689 = vsel %vm666, %v597, 0
      %v692 = vsel %vm666, %v598, 0
      %v695 = vsel %vm666, %v599, 0
      %v698 = vsel %vm666, %v600, 0
      %v701 = vsel %vm666, %v601, 0
      %v704 = vsel %vm666, %v602, 0
      %v707 = vsel %vm666, %v603, 0
      %v710 = vsel %vm666, %v604, 0
      %v713 = vsel %vm666, %v605, 0
      %v716 = vsel %vm666, %v606, 0
      %v719 = vsel %vm666, %v607, 0
      %v722 = vsel %vm666, %v608, 0
      %v725 = vsel %vm666, %v609, 0
      %v728 = vsel %vm666, %v610, 0
      %v731 = vsel %vm666, %v611, 0
      %v734 = vsel %vm666, %v612, 0
      %v737 = vsel %vm666, %v613, 0
      %v740 = vsel %vm666, %v614, 0
      %v743 = vsel %vm666, %v615, 0
      %v746 = vsel %vm666, %v616, 0
      %v749 = vsel %vm666, %v617, 0
      %v752 = vsel %vm666, %v618, 0
      %v755 = vsel %vm666, %v619, 0
      %v758 = vsel %vm666, %v620, 0
      %v761 = vsel %vm666, %v621, 0
      %v764 = vsel %vm666, %v622, 0
      %v767 = vsel %vm666, %v623, 0
      %v770 = vsel %vm666, %v624, 0
      %v773 = vsel %vm666, %v625, 0
      %v776 = vsel %vm666, %v626, 0
      %v779 = vsel %vm666, %v627, 0
      %v782 = vsel %vm666, %v628, 0
      %v785 = vsel %vm666, %v629, 0
      %v788 = vsel %vm666, %v630, 0
      %v791 = vsel %vm666, %v631, 0
      %v794 = vsel %vm666, %v632, 0
      %v797 = vsel %vm666, %v633, 0
      %v800 = vsel %vm666, %v634, 0
      %v803 = vsel %vm666, %v635, 0
      %v806 = vsel %vm666, %v636, 0
      %v809 = vsel %vm666, %v637, 0
      %v812 = vsel %vm666, %v638, 0
      %v815 = vsel %vm666, %v639, 0
      %v818 = vsel %vm666, %v640, 0
      %v821 = vsel %vm666, %v641, 0
      %v824 = vsel %vm666, %v642, 0
      %v827 = vsel %vm666, %v643, 0
      %v830 = vsel %vm666, %v644, 0
      %v833 = vsel %vm666, %v645, 0
      %v836 = vsel %vm666, %v646, 0
      %v839 = vsel %vm666, %v647, 0
      %v842 = vsel %vm666, %v648, 0
      %v845 = vsel %vm666, %v649, 0
      %v848 = vsel %vm666, %v650, 0
      %v851 = vsel %vm666, %v651, 0
      %v854 = vsel %vm666, %v652, 0
      %v857 = vsel %vm666, %v653, 0
      %859 = vmatprep.subr.bf16.mxu0 0
      %860 = vmatpush1.bf16.msra.mxu0 0
      %861 = vmatprep.subr.bf16.mxu0 0
      %862 = vmatpush1.bf16.msra.mxu0 0
      %863 = vmatprep.subr.bf16.mxu0 0
      %864 = vmatpush1.bf16.msra.mxu0 0
      %865 = vmatprep.subr.bf16.mxu0 0
      %866 = vmatpush1.bf16.msra.mxu0 0
      %867 = vmatprep.subr.bf16.mxu0 0
      %868 = vmatpush1.bf16.msra.mxu0 0
      %869 = vmatprep.subr.bf16.mxu0 0
      %870 = vmatpush1.bf16.msra.mxu0 0
      %871 = vmatprep.subr.bf16.mxu0 0
      %872 = vmatpush1.bf16.msra.mxu0 %v663
      %873 = vmatprep.subr.bf16.mxu0 0
      %874 = vmatpush1.bf16.msra.mxu0 %v662
      %875 = vmatprep.subr.bf16.mxu0 0
      %876 = vmatpush2.bf16.msra.mxu0 0
      %877 = vmatprep.subr.bf16.mxu0 0
      %878 = vmatpush2.bf16.msra.mxu0 0
      %879 = vmatprep.subr.bf16.mxu0 0
      %880 = vmatpush2.bf16.msra.mxu0 0
      %881 = vmatprep.subr.bf16.mxu0 0
      %882 = vmatpush2.bf16.msra.mxu0 0
      %883 = vmatprep.subr.bf16.mxu0 0
      %884 = vmatpush2.bf16.msra.mxu0 0
      %885 = vmatprep.subr.bf16.mxu0 0
      %886 = vmatpush2.bf16.msra.mxu0 0
      %887 = vmatprep.subr.bf16.mxu0 0
      %888 = vmatpush2.bf16.msra.mxu0 0
      %889 = vmatprep.subr.bf16.mxu0 0
      %890 = vmatpush2.bf16.msra.mxu0 0
      %891 = vmatprep.mubr.bf16.mxu0 0
      %892 = vmatmul.mubr.bf16.gmra.mxu0 %v668
      %v893 = vpop.f32.mrf.mxu0
      %v894 = vadd.f32 0.0, %v893
      %v895 = vpop.f32.mrf.mxu0
      %v896 = vpop.f32.mrf.mxu0
      %v897 = vadd.f32 0.0, %v896
      %v898 = vpop.f32.mrf.mxu0
      %899 = vmatprep.mubr.bf16.mxu0 0
      %900 = vmatmul.mubr.bf16.gmra.mxu0 %v671
      %v901 = vpop.f32.mrf.mxu0
      %v902 = vadd.f32 0.0, %v901
      %v903 = vpop.f32.mrf.mxu0
      %v904 = vpop.f32.mrf.mxu0
      %v905 = vadd.f32 0.0, %v904
      %v906 = vpop.f32.mrf.mxu0
      %907 = vmatprep.mubr.bf16.mxu0 0
      %908 = vmatmul.mubr.bf16.gmra.mxu0 %v674
      %v909 = vpop.f32.mrf.mxu0
      %v910 = vadd.f32 0.0, %v909
      %v911 = vpop.f32.mrf.mxu0
      %v912 = vpop.f32.mrf.mxu0
      %v913 = vadd.f32 0.0, %v912
      %v914 = vpop.f32.mrf.mxu0
      %915 = vmatprep.mubr.bf16.mxu0 0
      %916 = vmatmul.mubr.bf16.gmra.mxu0 %v677
      %v917 = vpop.f32.mrf.mxu0
      %v918 = vadd.f32 0.0, %v917
      %v919 = vpop.f32.mrf.mxu0
      %v920 = vpop.f32.mrf.mxu0
      %v921 = vadd.f32 0.0, %v920
      %v922 = vpop.f32.mrf.mxu0
      %923 = vmatprep.mubr.bf16.mxu0 0
      %924 = vmatmul.mubr.bf16.gmra.mxu0 %v680
      %v925 = vpop.f32.mrf.mxu0
      %v926 = vadd.f32 0.0, %v925
      %v927 = vpop.f32.mrf.mxu0
      %v928 = vpop.f32.mrf.mxu0
      %v929 = vadd.f32 0.0, %v928
      %v930 = vpop.f32.mrf.mxu0
      %931 = vmatprep.mubr.bf16.mxu0 0
      %932 = vmatmul.mubr.bf16.gmra.mxu0 %v683
      %v933 = vpop.f32.mrf.mxu0
      %v934 = vadd.f32 0.0, %v933
      %v935 = vpop.f32.mrf.mxu0
      %v936 = vpop.f32.mrf.mxu0
      %v937 = vadd.f32 0.0, %v936
      %v938 = vpop.f32.mrf.mxu0
      %939 = vmatprep.mubr.bf16.mxu0 0
      %940 = vmatmul.mubr.bf16.gmra.mxu0 %v686
      %v941 = vpop.f32.mrf.mxu0
      %v942 = vadd.f32 0.0, %v941
      %v943 = vpop.f32.mrf.mxu0
      %v944 = vpop.f32.mrf.mxu0
      %v945 = vadd.f32 0.0, %v944
      %v946 = vpop.f32.mrf.mxu0
      %947 = vmatprep.mubr.bf16.mxu0 0
      %948 = vmatmul.mubr.bf16.gmra.mxu0 %v689
      %v949 = vpop.f32.mrf.mxu0
      %v950 = vadd.f32 0.0, %v949
      %v951 = vpop.f32.mrf.mxu0
      %v952 = vpop.f32.mrf.mxu0
      %v953 = vadd.f32 0.0, %v952
      %v954 = vpop.f32.mrf.mxu0
      %955 = vmatprep.mubr.bf16.mxu0 0
      %956 = vmatmul.mubr.bf16.gmra.mxu0 %v692
      %v957 = vpop.f32.mrf.mxu0
      %v958 = vadd.f32 0.0, %v957
      %v959 = vpop.f32.mrf.mxu0
      %v960 = vpop.f32.mrf.mxu0
      %v961 = vadd.f32 0.0, %v960
      %v962 = vpop.f32.mrf.mxu0
      %963 = vmatprep.mubr.bf16.mxu0 0
      %964 = vmatmul.mubr.bf16.gmra.mxu0 %v695
      %v965 = vpop.f32.mrf.mxu0
      %v966 = vadd.f32 0.0, %v965
      %v967 = vpop.f32.mrf.mxu0
      %v968 = vpop.f32.mrf.mxu0
      %v969 = vadd.f32 0.0, %v968
      %v970 = vpop.f32.mrf.mxu0
      %971 = vmatprep.mubr.bf16.mxu0 0
      %972 = vmatmul.mubr.bf16.gmra.mxu0 %v698
      %v973 = vpop.f32.mrf.mxu0
      %v974 = vadd.f32 0.0, %v973
      %v975 = vpop.f32.mrf.mxu0
      %v976 = vpop.f32.mrf.mxu0
      %v977 = vadd.f32 0.0, %v976
      %v978 = vpop.f32.mrf.mxu0
      %979 = vmatprep.mubr.bf16.mxu0 0
      %980 = vmatmul.mubr.bf16.gmra.mxu0 %v701
      %v981 = vpop.f32.mrf.mxu0
      %v982 = vadd.f32 0.0, %v981
      %v983 = vpop.f32.mrf.mxu0
      %v984 = vpop.f32.mrf.mxu0
      %v985 = vadd.f32 0.0, %v984
      %v986 = vpop.f32.mrf.mxu0
      %987 = vmatprep.mubr.bf16.mxu0 0
      %988 = vmatmul.mubr.bf16.gmra.mxu0 %v704
      %v989 = vpop.f32.mrf.mxu0
      %v990 = vadd.f32 0.0, %v989
      %v991 = vpop.f32.mrf.mxu0
      %v992 = vpop.f32.mrf.mxu0
      %v993 = vadd.f32 0.0, %v992
      %v994 = vpop.f32.mrf.mxu0
      %995 = vmatprep.mubr.bf16.mxu0 0
      %996 = vmatmul.mubr.bf16.gmra.mxu0 %v707
      %v997 = vpop.f32.mrf.mxu0
      %v998 = vadd.f32 0.0, %v997
      %v999 = vpop.f32.mrf.mxu0
      %v1000 = vpop.f32.mrf.mxu0
      %v1001 = vadd.f32 0.0, %v1000
      %v1002 = vpop.f32.mrf.mxu0
      %1003 = vmatprep.mubr.bf16.mxu0 0
      %1004 = vmatmul.mubr.bf16.gmra.mxu0 %v710
      %v1005 = vpop.f32.mrf.mxu0
      %v1006 = vadd.f32 0.0, %v1005
      %v1007 = vpop.f32.mrf.mxu0
      %v1008 = vpop.f32.mrf.mxu0
      %v1009 = vadd.f32 0.0, %v1008
      %v1010 = vpop.f32.mrf.mxu0
      %1011 = vmatprep.mubr.bf16.mxu0 0
      %1012 = vmatmul.mubr.bf16.gmra.mxu0 %v713
      %v1013 = vpop.f32.mrf.mxu0
      %v1014 = vadd.f32 0.0, %v1013
      %v1015 = vpop.f32.mrf.mxu0
      %v1016 = vpop.f32.mrf.mxu0
      %v1017 = vadd.f32 0.0, %v1016
      %v1018 = vpop.f32.mrf.mxu0
      %1019 = vmatprep.mubr.bf16.mxu0 0
      %1020 = vmatmul.mubr.bf16.gmra.mxu0 %v716
      %v1021 = vpop.f32.mrf.mxu0
      %v1022 = vadd.f32 0.0, %v1021
      %v1023 = vpop.f32.mrf.mxu0
      %v1024 = vpop.f32.mrf.mxu0
      %v1025 = vadd.f32 0.0, %v1024
      %v1026 = vpop.f32.mrf.mxu0
      %1027 = vmatprep.mubr.bf16.mxu0 0
      %1028 = vmatmul.mubr.bf16.gmra.mxu0 %v719
      %v1029 = vpop.f32.mrf.mxu0
      %v1030 = vadd.f32 0.0, %v1029
      %v1031 = vpop.f32.mrf.mxu0
      %v1032 = vpop.f32.mrf.mxu0
      %v1033 = vadd.f32 0.0, %v1032
      %v1034 = vpop.f32.mrf.mxu0
      %1035 = vmatprep.mubr.bf16.mxu0 0
      %1036 = vmatmul.mubr.bf16.gmra.mxu0 %v722
      %v1037 = vpop.f32.mrf.mxu0
      %v1038 = vadd.f32 0.0, %v1037
      %v1039 = vpop.f32.mrf.mxu0
      %v1040 = vpop.f32.mrf.mxu0
      %v1041 = vadd.f32 0.0, %v1040
      %v1042 = vpop.f32.mrf.mxu0
      %1043 = vmatprep.mubr.bf16.mxu0 0
      %1044 = vmatmul.mubr.bf16.gmra.mxu0 %v725
      %v1045 = vpop.f32.mrf.mxu0
      %v1046 = vadd.f32 0.0, %v1045
      %v1047 = vpop.f32.mrf.mxu0
      %v1048 = vpop.f32.mrf.mxu0
      %v1049 = vadd.f32 0.0, %v1048
      %v1050 = vpop.f32.mrf.mxu0
      %1051 = vmatprep.mubr.bf16.mxu0 0
      %1052 = vmatmul.mubr.bf16.gmra.mxu0 %v728
      %v1053 = vpop.f32.mrf.mxu0
      %v1054 = vadd.f32 0.0, %v1053
      %v1055 = vpop.f32.mrf.mxu0
      %v1056 = vpop.f32.mrf.mxu0
      %v1057 = vadd.f32 0.0, %v1056
      %v1058 = vpop.f32.mrf.mxu0
      %1059 = vmatprep.mubr.bf16.mxu0 0
      %1060 = vmatmul.mubr.bf16.gmra.mxu0 %v731
      %v1061 = vpop.f32.mrf.mxu0
      %v1062 = vadd.f32 0.0, %v1061
      %v1063 = vpop.f32.mrf.mxu0
      %v1064 = vpop.f32.mrf.mxu0
      %v1065 = vadd.f32 0.0, %v1064
      %v1066 = vpop.f32.mrf.mxu0
      %1067 = vmatprep.mubr.bf16.mxu0 0
      %1068 = vmatmul.mubr.bf16.gmra.mxu0 %v734
      %v1069 = vpop.f32.mrf.mxu0
      %v1070 = vadd.f32 0.0, %v1069
      %v1071 = vpop.f32.mrf.mxu0
      %v1072 = vpop.f32.mrf.mxu0
      %v1073 = vadd.f32 0.0, %v1072
      %v1074 = vpop.f32.mrf.mxu0
      %1075 = vmatprep.mubr.bf16.mxu0 0
      %1076 = vmatmul.mubr.bf16.gmra.mxu0 %v737
      %v1077 = vpop.f32.mrf.mxu0
      %v1078 = vadd.f32 0.0, %v1077
      %v1079 = vpop.f32.mrf.mxu0
      %v1080 = vpop.f32.mrf.mxu0
      %v1081 = vadd.f32 0.0, %v1080
      %v1082 = vpop.f32.mrf.mxu0
      %1083 = vmatprep.mubr.bf16.mxu0 0
      %1084 = vmatmul.mubr.bf16.gmra.mxu0 %v740
      %v1085 = vpop.f32.mrf.mxu0
      %v1086 = vadd.f32 0.0, %v1085
      %v1087 = vpop.f32.mrf.mxu0
      %v1088 = vpop.f32.mrf.mxu0
      %v1089 = vadd.f32 0.0, %v1088
      %v1090 = vpop.f32.mrf.mxu0
      %1091 = vmatprep.mubr.bf16.mxu0 0
      %1092 = vmatmul.mubr.bf16.gmra.mxu0 %v743
      %v1093 = vpop.f32.mrf.mxu0
      %v1094 = vadd.f32 0.0, %v1093
      %v1095 = vpop.f32.mrf.mxu0
      %v1096 = vpop.f32.mrf.mxu0
      %v1097 = vadd.f32 0.0, %v1096
      %v1098 = vpop.f32.mrf.mxu0
      %1099 = vmatprep.mubr.bf16.mxu0 0
      %1100 = vmatmul.mubr.bf16.gmra.mxu0 %v746
      %v1101 = vpop.f32.mrf.mxu0
      %v1102 = vadd.f32 0.0, %v1101
      %v1103 = vpop.f32.mrf.mxu0
      %v1104 = vpop.f32.mrf.mxu0
      %v1105 = vadd.f32 0.0, %v1104
      %v1106 = vpop.f32.mrf.mxu0
      %1107 = vmatprep.mubr.bf16.mxu0 0
      %1108 = vmatmul.mubr.bf16.gmra.mxu0 %v749
      %v1109 = vpop.f32.mrf.mxu0
      %v1110 = vadd.f32 0.0, %v1109
      %v1111 = vpop.f32.mrf.mxu0
      %v1112 = vpop.f32.mrf.mxu0
      %v1113 = vadd.f32 0.0, %v1112
      %v1114 = vpop.f32.mrf.mxu0
      %1115 = vmatprep.mubr.bf16.mxu0 0
      %1116 = vmatmul.mubr.bf16.gmra.mxu0 %v752
      %v1117 = vpop.f32.mrf.mxu0
      %v1118 = vadd.f32 0.0, %v1117
      %v1119 = vpop.f32.mrf.mxu0
      %v1120 = vpop.f32.mrf.mxu0
      %v1121 = vadd.f32 0.0, %v1120
      %v1122 = vpop.f32.mrf.mxu0
      %1123 = vmatprep.mubr.bf16.mxu0 0
      %1124 = vmatmul.mubr.bf16.gmra.mxu0 %v755
      %v1125 = vpop.f32.mrf.mxu0
      %v1126 = vadd.f32 0.0, %v1125
      %v1127 = vpop.f32.mrf.mxu0
      %v1128 = vpop.f32.mrf.mxu0
      %v1129 = vadd.f32 0.0, %v1128
      %v1130 = vpop.f32.mrf.mxu0
      %1131 = vmatprep.mubr.bf16.mxu0 0
      %1132 = vmatmul.mubr.bf16.gmra.mxu0 %v758
      %v1133 = vpop.f32.mrf.mxu0
      %v1134 = vadd.f32 0.0, %v1133
      %v1135 = vpop.f32.mrf.mxu0
      %v1136 = vpop.f32.mrf.mxu0
      %v1137 = vadd.f32 0.0, %v1136
      %v1138 = vpop.f32.mrf.mxu0
      %1139 = vmatprep.mubr.bf16.mxu0 0
      %1140 = vmatmul.mubr.bf16.gmra.mxu0 %v761
      %v1141 = vpop.f32.mrf.mxu0
      %v1142 = vadd.f32 0.0, %v1141
      %v1143 = vpop.f32.mrf.mxu0
      %v1144 = vpop.f32.mrf.mxu0
      %v1145 = vadd.f32 0.0, %v1144
      %v1146 = vpop.f32.mrf.mxu0
      %1147 = vmatprep.mubr.bf16.mxu0 0
      %1148 = vmatmul.mubr.bf16.gmra.mxu0 %v764
      %v1149 = vpop.f32.mrf.mxu0
      %v1150 = vadd.f32 0.0, %v1149
      %v1151 = vpop.f32.mrf.mxu0
      %v1152 = vpop.f32.mrf.mxu0
      %v1153 = vadd.f32 0.0, %v1152
      %v1154 = vpop.f32.mrf.mxu0
      %1155 = vmatprep.mubr.bf16.mxu0 0
      %1156 = vmatmul.mubr.bf16.gmra.mxu0 %v767
      %v1157 = vpop.f32.mrf.mxu0
      %v1158 = vadd.f32 0.0, %v1157
      %v1159 = vpop.f32.mrf.mxu0
      %v1160 = vpop.f32.mrf.mxu0
      %v1161 = vadd.f32 0.0, %v1160
      %v1162 = vpop.f32.mrf.mxu0
      %1163 = vmatprep.mubr.bf16.mxu0 0
      %1164 = vmatmul.mubr.bf16.gmra.mxu0 %v770
      %v1165 = vpop.f32.mrf.mxu0
      %v1166 = vadd.f32 0.0, %v1165
      %v1167 = vpop.f32.mrf.mxu0
      %v1168 = vpop.f32.mrf.mxu0
      %v1169 = vadd.f32 0.0, %v1168
      %v1170 = vpop.f32.mrf.mxu0
      %1171 = vmatprep.mubr.bf16.mxu0 0
      %1172 = vmatmul.mubr.bf16.gmra.mxu0 %v773
      %v1173 = vpop.f32.mrf.mxu0
      %v1174 = vadd.f32 0.0, %v1173
      %v1175 = vpop.f32.mrf.mxu0
      %v1176 = vpop.f32.mrf.mxu0
      %v1177 = vadd.f32 0.0, %v1176
      %v1178 = vpop.f32.mrf.mxu0
      %1179 = vmatprep.mubr.bf16.mxu0 0
      %1180 = vmatmul.mubr.bf16.gmra.mxu0 %v776
      %v1181 = vpop.f32.mrf.mxu0
      %v1182 = vadd.f32 0.0, %v1181
      %v1183 = vpop.f32.mrf.mxu0
      %v1184 = vpop.f32.mrf.mxu0
      %v1185 = vadd.f32 0.0, %v1184
      %v1186 = vpop.f32.mrf.mxu0
      %1187 = vmatprep.mubr.bf16.mxu0 0
      %1188 = vmatmul.mubr.bf16.gmra.mxu0 %v779
      %v1189 = vpop.f32.mrf.mxu0
      %v1190 = vadd.f32 0.0, %v1189
      %v1191 = vpop.f32.mrf.mxu0
      %v1192 = vpop.f32.mrf.mxu0
      %v1193 = vadd.f32 0.0, %v1192
      %v1194 = vpop.f32.mrf.mxu0
      %1195 = vmatprep.mubr.bf16.mxu0 0
      %1196 = vmatmul.mubr.bf16.gmra.mxu0 %v782
      %v1197 = vpop.f32.mrf.mxu0
      %v1198 = vadd.f32 0.0, %v1197
      %v1199 = vpop.f32.mrf.mxu0
      %v1200 = vpop.f32.mrf.mxu0
      %v1201 = vadd.f32 0.0, %v1200
      %v1202 = vpop.f32.mrf.mxu0
      %1203 = vmatprep.mubr.bf16.mxu0 0
      %1204 = vmatmul.mubr.bf16.gmra.mxu0 %v785
      %v1205 = vpop.f32.mrf.mxu0
      %v1206 = vadd.f32 0.0, %v1205
      %v1207 = vpop.f32.mrf.mxu0
      %v1208 = vpop.f32.mrf.mxu0
      %v1209 = vadd.f32 0.0, %v1208
      %v1210 = vpop.f32.mrf.mxu0
      %1211 = vmatprep.mubr.bf16.mxu0 0
      %1212 = vmatmul.mubr.bf16.gmra.mxu0 %v788
      %v1213 = vpop.f32.mrf.mxu0
      %v1214 = vadd.f32 0.0, %v1213
      %v1215 = vpop.f32.mrf.mxu0
      %v1216 = vpop.f32.mrf.mxu0
      %v1217 = vadd.f32 0.0, %v1216
      %v1218 = vpop.f32.mrf.mxu0
      %1219 = vmatprep.mubr.bf16.mxu0 0
      %1220 = vmatmul.mubr.bf16.gmra.mxu0 %v791
      %v1221 = vpop.f32.mrf.mxu0
      %v1222 = vadd.f32 0.0, %v1221
      %v1223 = vpop.f32.mrf.mxu0
      %v1224 = vpop.f32.mrf.mxu0
      %v1225 = vadd.f32 0.0, %v1224
      %v1226 = vpop.f32.mrf.mxu0
      %1227 = vmatprep.mubr.bf16.mxu0 0
      %1228 = vmatmul.mubr.bf16.gmra.mxu0 %v794
      %v1229 = vpop.f32.mrf.mxu0
      %v1230 = vadd.f32 0.0, %v1229
      %v1231 = vpop.f32.mrf.mxu0
      %v1232 = vpop.f32.mrf.mxu0
      %v1233 = vadd.f32 0.0, %v1232
      %v1234 = vpop.f32.mrf.mxu0
      %1235 = vmatprep.mubr.bf16.mxu0 0
      %1236 = vmatmul.mubr.bf16.gmra.mxu0 %v797
      %v1237 = vpop.f32.mrf.mxu0
      %v1238 = vadd.f32 0.0, %v1237
      %v1239 = vpop.f32.mrf.mxu0
      %v1240 = vpop.f32.mrf.mxu0
      %v1241 = vadd.f32 0.0, %v1240
      %v1242 = vpop.f32.mrf.mxu0
      %1243 = vmatprep.mubr.bf16.mxu0 0
      %1244 = vmatmul.mubr.bf16.gmra.mxu0 %v800
      %v1245 = vpop.f32.mrf.mxu0
      %v1246 = vadd.f32 0.0, %v1245
      %v1247 = vpop.f32.mrf.mxu0
      %v1248 = vpop.f32.mrf.mxu0
      %v1249 = vadd.f32 0.0, %v1248
      %v1250 = vpop.f32.mrf.mxu0
      %1251 = vmatprep.mubr.bf16.mxu0 0
      %1252 = vmatmul.mubr.bf16.gmra.mxu0 %v803
      %v1253 = vpop.f32.mrf.mxu0
      %v1254 = vadd.f32 0.0, %v1253
      %v1255 = vpop.f32.mrf.mxu0
      %v1256 = vpop.f32.mrf.mxu0
      %v1257 = vadd.f32 0.0, %v1256
      %v1258 = vpop.f32.mrf.mxu0
      %1259 = vmatprep.mubr.bf16.mxu0 0
      %1260 = vmatmul.mubr.bf16.gmra.mxu0 %v806
      %v1261 = vpop.f32.mrf.mxu0
      %v1262 = vadd.f32 0.0, %v1261
      %v1263 = vpop.f32.mrf.mxu0
      %v1264 = vpop.f32.mrf.mxu0
      %v1265 = vadd.f32 0.0, %v1264
      %v1266 = vpop.f32.mrf.mxu0
      %1267 = vmatprep.mubr.bf16.mxu0 0
      %1268 = vmatmul.mubr.bf16.gmra.mxu0 %v809
      %v1269 = vpop.f32.mrf.mxu0
      %v1270 = vadd.f32 0.0, %v1269
      %v1271 = vpop.f32.mrf.mxu0
      %v1272 = vpop.f32.mrf.mxu0
      %v1273 = vadd.f32 0.0, %v1272
      %v1274 = vpop.f32.mrf.mxu0
      %1275 = vmatprep.mubr.bf16.mxu0 0
      %1276 = vmatmul.mubr.bf16.gmra.mxu0 %v812
      %v1277 = vpop.f32.mrf.mxu0
      %v1278 = vadd.f32 0.0, %v1277
      %v1279 = vpop.f32.mrf.mxu0
      %v1280 = vpop.f32.mrf.mxu0
      %v1281 = vadd.f32 0.0, %v1280
      %v1282 = vpop.f32.mrf.mxu0
      %1283 = vmatprep.mubr.bf16.mxu0 0
      %1284 = vmatmul.mubr.bf16.gmra.mxu0 %v815
      %v1285 = vpop.f32.mrf.mxu0
      %v1286 = vadd.f32 0.0, %v1285
      %v1287 = vpop.f32.mrf.mxu0
      %v1288 = vpop.f32.mrf.mxu0
      %v1289 = vadd.f32 0.0, %v1288
      %v1290 = vpop.f32.mrf.mxu0
      %1291 = vmatprep.mubr.bf16.mxu0 0
      %1292 = vmatmul.mubr.bf16.gmra.mxu0 %v818
      %v1293 = vpop.f32.mrf.mxu0
      %v1294 = vadd.f32 0.0, %v1293
      %v1295 = vpop.f32.mrf.mxu0
      %v1296 = vpop.f32.mrf.mxu0
      %v1297 = vadd.f32 0.0, %v1296
      %v1298 = vpop.f32.mrf.mxu0
      %1299 = vmatprep.mubr.bf16.mxu0 0
      %1300 = vmatmul.mubr.bf16.gmra.mxu0 %v821
      %v1301 = vpop.f32.mrf.mxu0
      %v1302 = vadd.f32 0.0, %v1301
      %v1303 = vpop.f32.mrf.mxu0
      %v1304 = vpop.f32.mrf.mxu0
      %v1305 = vadd.f32 0.0, %v1304
      %v1306 = vpop.f32.mrf.mxu0
      %1307 = vmatprep.mubr.bf16.mxu0 0
      %1308 = vmatmul.mubr.bf16.gmra.mxu0 %v824
      %v1309 = vpop.f32.mrf.mxu0
      %v1310 = vadd.f32 0.0, %v1309
      %v1311 = vpop.f32.mrf.mxu0
      %v1312 = vpop.f32.mrf.mxu0
      %v1313 = vadd.f32 0.0, %v1312
      %v1314 = vpop.f32.mrf.mxu0
      %1315 = vmatprep.mubr.bf16.mxu0 0
      %1316 = vmatmul.mubr.bf16.gmra.mxu0 %v827
      %v1317 = vpop.f32.mrf.mxu0
      %v1318 = vadd.f32 0.0, %v1317
      %v1319 = vpop.f32.mrf.mxu0
      %v1320 = vpop.f32.mrf.mxu0
      %v1321 = vadd.f32 0.0, %v1320
      %v1322 = vpop.f32.mrf.mxu0
      %1323 = vmatprep.mubr.bf16.mxu0 0
      %1324 = vmatmul.mubr.bf16.gmra.mxu0 %v830
      %v1325 = vpop.f32.mrf.mxu0
      %v1326 = vadd.f32 0.0, %v1325
      %v1327 = vpop.f32.mrf.mxu0
      %v1328 = vpop.f32.mrf.mxu0
      %v1329 = vadd.f32 0.0, %v1328
      %v1330 = vpop.f32.mrf.mxu0
      %1331 = vmatprep.mubr.bf16.mxu0 0
      %1332 = vmatmul.mubr.bf16.gmra.mxu0 %v833
      %v1333 = vpop.f32.mrf.mxu0
      %v1334 = vadd.f32 0.0, %v1333
      %v1335 = vpop.f32.mrf.mxu0
      %v1336 = vpop.f32.mrf.mxu0
      %v1337 = vadd.f32 0.0, %v1336
      %v1338 = vpop.f32.mrf.mxu0
      %1339 = vmatprep.mubr.bf16.mxu0 0
      %1340 = vmatmul.mubr.bf16.gmra.mxu0 %v836
      %v1341 = vpop.f32.mrf.mxu0
      %v1342 = vadd.f32 0.0, %v1341
      %v1343 = vpop.f32.mrf.mxu0
      %v1344 = vpop.f32.mrf.mxu0
      %v1345 = vadd.f32 0.0, %v1344
      %v1346 = vpop.f32.mrf.mxu0
      %1347 = vmatprep.mubr.bf16.mxu0 0
      %1348 = vmatmul.mubr.bf16.gmra.mxu0 %v839
      %v1349 = vpop.f32.mrf.mxu0
      %v1350 = vadd.f32 0.0, %v1349
      %v1351 = vpop.f32.mrf.mxu0
      %v1352 = vpop.f32.mrf.mxu0
      %v1353 = vadd.f32 0.0, %v1352
      %v1354 = vpop.f32.mrf.mxu0
      %1355 = vmatprep.mubr.bf16.mxu0 0
      %1356 = vmatmul.mubr.bf16.gmra.mxu0 %v842
      %v1357 = vpop.f32.mrf.mxu0
      %v1358 = vadd.f32 0.0, %v1357
      %v1359 = vpop.f32.mrf.mxu0
      %v1360 = vpop.f32.mrf.mxu0
      %v1361 = vadd.f32 0.0, %v1360
      %v1362 = vpop.f32.mrf.mxu0
      %1363 = vmatprep.mubr.bf16.mxu0 0
      %1364 = vmatmul.mubr.bf16.gmra.mxu0 %v845
      %v1365 = vpop.f32.mrf.mxu0
      %v1366 = vadd.f32 0.0, %v1365
      %v1367 = vpop.f32.mrf.mxu0
      %v1368 = vpop.f32.mrf.mxu0
      %v1369 = vadd.f32 0.0, %v1368
      %v1370 = vpop.f32.mrf.mxu0
      %1371 = vmatprep.mubr.bf16.mxu0 0
      %1372 = vmatmul.mubr.bf16.gmra.mxu0 %v848
      %v1373 = vpop.f32.mrf.mxu0
      %v1374 = vadd.f32 0.0, %v1373
      %v1375 = vpop.f32.mrf.mxu0
      %v1376 = vpop.f32.mrf.mxu0
      %v1377 = vadd.f32 0.0, %v1376
      %v1378 = vpop.f32.mrf.mxu0
      %1379 = vmatprep.mubr.bf16.mxu0 0
      %1380 = vmatmul.mubr.bf16.gmra.mxu0 %v851
      %v1381 = vpop.f32.mrf.mxu0
      %v1382 = vadd.f32 0.0, %v1381
      %v1383 = vpop.f32.mrf.mxu0
      %v1384 = vpop.f32.mrf.mxu0
      %v1385 = vadd.f32 0.0, %v1384
      %v1386 = vpop.f32.mrf.mxu0
      %1387 = vmatprep.mubr.bf16.mxu0 0
      %1388 = vmatmul.mubr.bf16.gmra.mxu0 %v854
      %v1389 = vpop.f32.mrf.mxu0
      %v1390 = vadd.f32 0.0, %v1389
      %v1391 = vpop.f32.mrf.mxu0
      %v1392 = vpop.f32.mrf.mxu0
      %v1393 = vadd.f32 0.0, %v1392
      %v1394 = vpop.f32.mrf.mxu0
      %1395 = vmatprep.mubr.bf16.mxu0 0
      %1396 = vmatmul.mubr.bf16.gmra.mxu0 %v857
      %v1397 = vpop.f32.mrf.mxu0
      %v1398 = vadd.f32 0.0, %v1397
      %v1399 = vpop.f32.mrf.mxu0
      %v1400 = vpop.f32.mrf.mxu0
      %v1401 = vadd.f32 0.0, %v1400
      %v1402 = vpop.f32.mrf.mxu0
      %1403 = vdwg.mxu0
      %v1404 = vld [vmem:[%s2] sm:$0x1]
      %v1406 = vlaneseq
      %v1407 = vshrl.u32 %v1406, 7
      %v1408 = vsub.s32 0, %v1407
      %v1409 = vrot.slane %v1404, %v1408
      %v1411 = vmul.f32 %v894, %v1409
      %v1412 = vmul.f32 %v897, %v1409
      %v1413 = vmul.f32 %v902, %v1409
      %v1414 = vmul.f32 %v905, %v1409
      %v1415 = vmul.f32 %v910, %v1409
      %v1416 = vmul.f32 %v913, %v1409
      %v1417 = vmul.f32 %v918, %v1409
      %v1418 = vmul.f32 %v921, %v1409
      %v1419 = vmul.f32 %v926, %v1409
      %v1420 = vmul.f32 %v929, %v1409
      %v1421 = vmul.f32 %v934, %v1409
      %v1422 = vmul.f32 %v937, %v1409
      %v1423 = vmul.f32 %v942, %v1409
      %v1424 = vmul.f32 %v945, %v1409
      %v1425 = vmul.f32 %v950, %v1409
      %v1426 = vmul.f32 %v953, %v1409
      %v1427 = vmul.f32 %v958, %v1409
      %v1428 = vmul.f32 %v961, %v1409
      %v1429 = vmul.f32 %v966, %v1409
      %v1430 = vmul.f32 %v969, %v1409
      %v1431 = vmul.f32 %v974, %v1409
      %v1432 = vmul.f32 %v977, %v1409
      %v1433 = vmul.f32 %v982, %v1409
      %v1434 = vmul.f32 %v985, %v1409
      %v1435 = vmul.f32 %v990, %v1409
      %v1436 = vmul.f32 %v993, %v1409
      %v1437 = vmul.f32 %v998, %v1409
      %v1438 = vmul.f32 %v1001, %v1409
      %v1439 = vmul.f32 %v1006, %v1409
      %v1440 = vmul.f32 %v1009, %v1409
      %v1441 = vmul.f32 %v1014, %v1409
      %v1442 = vmul.f32 %v1017, %v1409
      %v1443 = vmul.f32 %v1022, %v1409
      %v1444 = vmul.f32 %v1025, %v1409
      %v1445 = vmul.f32 %v1030, %v1409
      %v1446 = vmul.f32 %v1033, %v1409
      %v1447 = vmul.f32 %v1038, %v1409
      %v1448 = vmul.f32 %v1041, %v1409
      %v1449 = vmul.f32 %v1046, %v1409
      %v1450 = vmul.f32 %v1049, %v1409
      %v1451 = vmul.f32 %v1054, %v1409
      %v1452 = vmul.f32 %v1057, %v1409
      %v1453 = vmul.f32 %v1062, %v1409
      %v1454 = vmul.f32 %v1065, %v1409
      %v1455 = vmul.f32 %v1070, %v1409
      %v1456 = vmul.f32 %v1073, %v1409
      %v1457 = vmul.f32 %v1078, %v1409
      %v1458 = vmul.f32 %v1081, %v1409
      %v1459 = vmul.f32 %v1086, %v1409
      %v1460 = vmul.f32 %v1089, %v1409
      %v1461 = vmul.f32 %v1094, %v1409
      %v1462 = vmul.f32 %v1097, %v1409
      %v1463 = vmul.f32 %v1102, %v1409
      %v1464 = vmul.f32 %v1105, %v1409
      %v1465 = vmul.f32 %v1110, %v1409
      %v1466 = vmul.f32 %v1113, %v1409
      %v1467 = vmul.f32 %v1118, %v1409
      %v1468 = vmul.f32 %v1121, %v1409
      %v1469 = vmul.f32 %v1126, %v1409
      %v1470 = vmul.f32 %v1129, %v1409
      %v1471 = vmul.f32 %v1134, %v1409
      %v1472 = vmul.f32 %v1137, %v1409
      %v1473 = vmul.f32 %v1142, %v1409
      %v1474 = vmul.f32 %v1145, %v1409
      %v1475 = vmul.f32 %v1150, %v1409
      %v1476 = vmul.f32 %v1153, %v1409
      %v1477 = vmul.f32 %v1158, %v1409
      %v1478 = vmul.f32 %v1161, %v1409
      %v1479 = vmul.f32 %v1166, %v1409
      %v1480 = vmul.f32 %v1169, %v1409
      %v1481 = vmul.f32 %v1174, %v1409
      %v1482 = vmul.f32 %v1177, %v1409
      %v1483 = vmul.f32 %v1182, %v1409
      %v1484 = vmul.f32 %v1185, %v1409
      %v1485 = vmul.f32 %v1190, %v1409
      %v1486 = vmul.f32 %v1193, %v1409
      %v1487 = vmul.f32 %v1198, %v1409
      %v1488 = vmul.f32 %v1201, %v1409
      %v1489 = vmul.f32 %v1206, %v1409
      %v1490 = vmul.f32 %v1209, %v1409
      %v1491 = vmul.f32 %v1214, %v1409
      %v1492 = vmul.f32 %v1217, %v1409
      %v1493 = vmul.f32 %v1222, %v1409
      %v1494 = vmul.f32 %v1225, %v1409
      %v1495 = vmul.f32 %v1230, %v1409
      %v1496 = vmul.f32 %v1233, %v1409
      %v1497 = vmul.f32 %v1238, %v1409
      %v1498 = vmul.f32 %v1241, %v1409
      %v1499 = vmul.f32 %v1246, %v1409
      %v1500 = vmul.f32 %v1249, %v1409
      %v1501 = vmul.f32 %v1254, %v1409
      %v1502 = vmul.f32 %v1257, %v1409
      %v1503 = vmul.f32 %v1262, %v1409
      %v1504 = vmul.f32 %v1265, %v1409
      %v1505 = vmul.f32 %v1270, %v1409
      %v1506 = vmul.f32 %v1273, %v1409
      %v1507 = vmul.f32 %v1278, %v1409
      %v1508 = vmul.f32 %v1281, %v1409
      %v1509 = vmul.f32 %v1286, %v1409
      %v1510 = vmul.f32 %v1289, %v1409
      %v1511 = vmul.f32 %v1294, %v1409
      %v1512 = vmul.f32 %v1297, %v1409
      %v1513 = vmul.f32 %v1302, %v1409
      %v1514 = vmul.f32 %v1305, %v1409
      %v1515 = vmul.f32 %v1310, %v1409
      %v1516 = vmul.f32 %v1313, %v1409
      %v1517 = vmul.f32 %v1318, %v1409
      %v1518 = vmul.f32 %v1321, %v1409
      %v1519 = vmul.f32 %v1326, %v1409
      %v1520 = vmul.f32 %v1329, %v1409
      %v1521 = vmul.f32 %v1334, %v1409
      %v1522 = vmul.f32 %v1337, %v1409
      %v1523 = vmul.f32 %v1342, %v1409
      %v1524 = vmul.f32 %v1345, %v1409
      %v1525 = vmul.f32 %v1350, %v1409
      %v1526 = vmul.f32 %v1353, %v1409
      %v1527 = vmul.f32 %v1358, %v1409
      %v1528 = vmul.f32 %v1361, %v1409
      %v1529 = vmul.f32 %v1366, %v1409
      %v1530 = vmul.f32 %v1369, %v1409
      %v1531 = vmul.f32 %v1374, %v1409
      %v1532 = vmul.f32 %v1377, %v1409
      %v1533 = vmul.f32 %v1382, %v1409
      %v1534 = vmul.f32 %v1385, %v1409
      %v1535 = vmul.f32 %v1390, %v1409
      %v1536 = vmul.f32 %v1393, %v1409
      %v1537 = vmul.f32 %v1398, %v1409
      %v1538 = vmul.f32 %v1401, %v1409
      %v1539 = vld [vmem:[%s3] sm:$0x1]
      %v1541 = vlaneseq
      %v1542 = vshrl.u32 %v1541, 7
      %v1543 = vsub.s32 0, %v1542
      %v1544 = vrot.slane %v1539, %v1543
      %v1546 = vadd.f32 %v1411, %v1544
      %v1547 = vadd.f32 %v1412, %v1544
      %v1548 = vadd.f32 %v1413, %v1544
      %v1549 = vadd.f32 %v1414, %v1544
      %v1550 = vadd.f32 %v1415, %v1544
      %v1551 = vadd.f32 %v1416, %v1544
      %v1552 = vadd.f32 %v1417, %v1544
      %v1553 = vadd.f32 %v1418, %v1544
      %v1554 = vadd.f32 %v1419, %v1544
      %v1555 = vadd.f32 %v1420, %v1544
      %v1556 = vadd.f32 %v1421, %v1544
      %v1557 = vadd.f32 %v1422, %v1544
      %v1558 = vadd.f32 %v1423, %v1544
      %v1559 = vadd.f32 %v1424, %v1544
      %v1560 = vadd.f32 %v1425, %v1544
      %v1561 = vadd.f32 %v1426, %v1544
      %v1562 = vadd.f32 %v1427, %v1544
      %v1563 = vadd.f32 %v1428, %v1544
      %v1564 = vadd.f32 %v1429, %v1544
      %v1565 = vadd.f32 %v1430, %v1544
      %v1566 = vadd.f32 %v1431, %v1544
      %v1567 = vadd.f32 %v1432, %v1544
      %v1568 = vadd.f32 %v1433, %v1544
      %v1569 = vadd.f32 %v1434, %v1544
      %v1570 = vadd.f32 %v1435, %v1544
      %v1571 = vadd.f32 %v1436, %v1544
      %v1572 = vadd.f32 %v1437, %v1544
      %v1573 = vadd.f32 %v1438, %v1544
      %v1574 = vadd.f32 %v1439, %v1544
      %v1575 = vadd.f32 %v1440, %v1544
      %v1576 = vadd.f32 %v1441, %v1544
      %v1577 = vadd.f32 %v1442, %v1544
      %v1578 = vadd.f32 %v1443, %v1544
      %v1579 = vadd.f32 %v1444, %v1544
      %v1580 = vadd.f32 %v1445, %v1544
      %v1581 = vadd.f32 %v1446, %v1544
      %v1582 = vadd.f32 %v1447, %v1544
      %v1583 = vadd.f32 %v1448, %v1544
      %v1584 = vadd.f32 %v1449, %v1544
      %v1585 = vadd.f32 %v1450, %v1544
      %v1586 = vadd.f32 %v1451, %v1544
      %v1587 = vadd.f32 %v1452, %v1544
      %v1588 = vadd.f32 %v1453, %v1544
      %v1589 = vadd.f32 %v1454, %v1544
      %v1590 = vadd.f32 %v1455, %v1544
      %v1591 = vadd.f32 %v1456, %v1544
      %v1592 = vadd.f32 %v1457, %v1544
      %v1593 = vadd.f32 %v1458, %v1544
      %v1594 = vadd.f32 %v1459, %v1544
      %v1595 = vadd.f32 %v1460, %v1544
      %v1596 = vadd.f32 %v1461, %v1544
      %v1597 = vadd.f32 %v1462, %v1544
      %v1598 = vadd.f32 %v1463, %v1544
      %v1599 = vadd.f32 %v1464, %v1544
      %v1600 = vadd.f32 %v1465, %v1544
      %v1601 = vadd.f32 %v1466, %v1544
      %v1602 = vadd.f32 %v1467, %v1544
      %v1603 = vadd.f32 %v1468, %v1544
      %v1604 = vadd.f32 %v1469, %v1544
      %v1605 = vadd.f32 %v1470, %v1544
      %v1606 = vadd.f32 %v1471, %v1544
      %v1607 = vadd.f32 %v1472, %v1544
      %v1608 = vadd.f32 %v1473, %v1544
      %v1609 = vadd.f32 %v1474, %v1544
      %v1610 = vadd.f32 %v1475, %v1544
      %v1611 = vadd.f32 %v1476, %v1544
      %v1612 = vadd.f32 %v1477, %v1544
      %v1613 = vadd.f32 %v1478, %v1544
      %v1614 = vadd.f32 %v1479, %v1544
      %v1615 = vadd.f32 %v1480, %v1544
      %v1616 = vadd.f32 %v1481, %v1544
      %v1617 = vadd.f32 %v1482, %v1544
      %v1618 = vadd.f32 %v1483, %v1544
      %v1619 = vadd.f32 %v1484, %v1544
      %v1620 = vadd.f32 %v1485, %v1544
      %v1621 = vadd.f32 %v1486, %v1544
      %v1622 = vadd.f32 %v1487, %v1544
      %v1623 = vadd.f32 %v1488, %v1544
      %v1624 = vadd.f32 %v1489, %v1544
      %v1625 = vadd.f32 %v1490, %v1544
      %v1626 = vadd.f32 %v1491, %v1544
      %v1627 = vadd.f32 %v1492, %v1544
      %v1628 = vadd.f32 %v1493, %v1544
      %v1629 = vadd.f32 %v1494, %v1544
      %v1630 = vadd.f32 %v1495, %v1544
      %v1631 = vadd.f32 %v1496, %v1544
      %v1632 = vadd.f32 %v1497, %v1544
      %v1633 = vadd.f32 %v1498, %v1544
      %v1634 = vadd.f32 %v1499, %v1544
      %v1635 = vadd.f32 %v1500, %v1544
      %v1636 = vadd.f32 %v1501, %v1544
      %v1637 = vadd.f32 %v1502, %v1544
      %v1638 = vadd.f32 %v1503, %v1544
      %v1639 = vadd.f32 %v1504, %v1544
      %v1640 = vadd.f32 %v1505, %v1544
      %v1641 = vadd.f32 %v1506, %v1544
      %v1642 = vadd.f32 %v1507, %v1544
      %v1643 = vadd.f32 %v1508, %v1544
      %v1644 = vadd.f32 %v1509, %v1544
      %v1645 = vadd.f32 %v1510, %v1544
      %v1646 = vadd.f32 %v1511, %v1544
      %v1647 = vadd.f32 %v1512, %v1544
      %v1648 = vadd.f32 %v1513, %v1544
      %v1649 = vadd.f32 %v1514, %v1544
      %v1650 = vadd.f32 %v1515, %v1544
      %v1651 = vadd.f32 %v1516, %v1544
      %v1652 = vadd.f32 %v1517, %v1544
      %v1653 = vadd.f32 %v1518, %v1544
      %v1654 = vadd.f32 %v1519, %v1544
      %v1655 = vadd.f32 %v1520, %v1544
      %v1656 = vadd.f32 %v1521, %v1544
      %v1657 = vadd.f32 %v1522, %v1544
      %v1658 = vadd.f32 %v1523, %v1544
      %v1659 = vadd.f32 %v1524, %v1544
      %v1660 = vadd.f32 %v1525, %v1544
      %v1661 = vadd.f32 %v1526, %v1544
      %v1662 = vadd.f32 %v1527, %v1544
      %v1663 = vadd.f32 %v1528, %v1544
      %v1664 = vadd.f32 %v1529, %v1544
      %v1665 = vadd.f32 %v1530, %v1544
      %v1666 = vadd.f32 %v1531, %v1544
      %v1667 = vadd.f32 %v1532, %v1544
      %v1668 = vadd.f32 %v1533, %v1544
      %v1669 = vadd.f32 %v1534, %v1544
      %v1670 = vadd.f32 %v1535, %v1544
      %v1671 = vadd.f32 %v1536, %v1544
      %v1672 = vadd.f32 %v1537, %v1544
      %v1673 = vadd.f32 %v1538, %v1544
      %v1674 = vmax.f32 %v1546, 0.0
      %v1675 = vmax.f32 %v1547, 0.0
      %v1676 = vmax.f32 %v1548, 0.0
      %v1677 = vmax.f32 %v1549, 0.0
      %v1678 = vmax.f32 %v1550, 0.0
      %v1679 = vmax.f32 %v1551, 0.0
      %v1680 = vmax.f32 %v1552, 0.0
      %v1681 = vmax.f32 %v1553, 0.0
      %v1682 = vmax.f32 %v1554, 0.0
      %v1683 = vmax.f32 %v1555, 0.0
      %v1684 = vmax.f32 %v1556, 0.0
      %v1685 = vmax.f32 %v1557, 0.0
      %v1686 = vmax.f32 %v1558, 0.0
      %v1687 = vmax.f32 %v1559, 0.0
      %v1688 = vmax.f32 %v1560, 0.0
      %v1689 = vmax.f32 %v1561, 0.0
      %v1690 = vmax.f32 %v1562, 0.0
      %v1691 = vmax.f32 %v1563, 0.0
      %v1692 = vmax.f32 %v1564, 0.0
      %v1693 = vmax.f32 %v1565, 0.0
      %v1694 = vmax.f32 %v1566, 0.0
      %v1695 = vmax.f32 %v1567, 0.0
      %v1696 = vmax.f32 %v1568, 0.0
      %v1697 = vmax.f32 %v1569, 0.0
      %v1698 = vmax.f32 %v1570, 0.0
      %v1699 = vmax.f32 %v1571, 0.0
      %v1700 = vmax.f32 %v1572, 0.0
      %v1701 = vmax.f32 %v1573, 0.0
      %v1702 = vmax.f32 %v1574, 0.0
      %v1703 = vmax.f32 %v1575, 0.0
      %v1704 = vmax.f32 %v1576, 0.0
      %v1705 = vmax.f32 %v1577, 0.0
      %v1706 = vmax.f32 %v1578, 0.0
      %v1707 = vmax.f32 %v1579, 0.0
      %v1708 = vmax.f32 %v1580, 0.0
      %v1709 = vmax.f32 %v1581, 0.0
      %v1710 = vmax.f32 %v1582, 0.0
      %v1711 = vmax.f32 %v1583, 0.0
      %v1712 = vmax.f32 %v1584, 0.0
      %v1713 = vmax.f32 %v1585, 0.0
      %v1714 = vmax.f32 %v1586, 0.0
      %v1715 = vmax.f32 %v1587, 0.0
      %v1716 = vmax.f32 %v1588, 0.0
      %v1717 = vmax.f32 %v1589, 0.0
      %v1718 = vmax.f32 %v1590, 0.0
      %v1719 = vmax.f32 %v1591, 0.0
      %v1720 = vmax.f32 %v1592, 0.0
      %v1721 = vmax.f32 %v1593, 0.0
      %v1722 = vmax.f32 %v1594, 0.0
      %v1723 = vmax.f32 %v1595, 0.0
      %v1724 = vmax.f32 %v1596, 0.0
      %v1725 = vmax.f32 %v1597, 0.0
      %v1726 = vmax.f32 %v1598, 0.0
      %v1727 = vmax.f32 %v1599, 0.0
      %v1728 = vmax.f32 %v1600, 0.0
      %v1729 = vmax.f32 %v1601, 0.0
      %v1730 = vmax.f32 %v1602, 0.0
      %v1731 = vmax.f32 %v1603, 0.0
      %v1732 = vmax.f32 %v1604, 0.0
      %v1733 = vmax.f32 %v1605, 0.0
      %v1734 = vmax.f32 %v1606, 0.0
      %v1735 = vmax.f32 %v1607, 0.0
      %v1736 = vmax.f32 %v1608, 0.0
      %v1737 = vmax.f32 %v1609, 0.0
      %v1738 = vmax.f32 %v1610, 0.0
      %v1739 = vmax.f32 %v1611, 0.0
      %v1740 = vmax.f32 %v1612, 0.0
      %v1741 = vmax.f32 %v1613, 0.0
      %v1742 = vmax.f32 %v1614, 0.0
      %v1743 = vmax.f32 %v1615, 0.0
      %v1744 = vmax.f32 %v1616, 0.0
      %v1745 = vmax.f32 %v1617, 0.0
      %v1746 = vmax.f32 %v1618, 0.0
      %v1747 = vmax.f32 %v1619, 0.0
      %v1748 = vmax.f32 %v1620, 0.0
      %v1749 = vmax.f32 %v1621, 0.0
      %v1750 = vmax.f32 %v1622, 0.0
      %v1751 = vmax.f32 %v1623, 0.0
      %v1752 = vmax.f32 %v1624, 0.0
      %v1753 = vmax.f32 %v1625, 0.0
      %v1754 = vmax.f32 %v1626, 0.0
      %v1755 = vmax.f32 %v1627, 0.0
      %v1756 = vmax.f32 %v1628, 0.0
      %v1757 = vmax.f32 %v1629, 0.0
      %v1758 = vmax.f32 %v1630, 0.0
      %v1759 = vmax.f32 %v1631, 0.0
      %v1760 = vmax.f32 %v1632, 0.0
      %v1761 = vmax.f32 %v1633, 0.0
      %v1762 = vmax.f32 %v1634, 0.0
      %v1763 = vmax.f32 %v1635, 0.0
      %v1764 = vmax.f32 %v1636, 0.0
      %v1765 = vmax.f32 %v1637, 0.0
      %v1766 = vmax.f32 %v1638, 0.0
      %v1767 = vmax.f32 %v1639, 0.0
      %v1768 = vmax.f32 %v1640, 0.0
      %v1769 = vmax.f32 %v1641, 0.0
      %v1770 = vmax.f32 %v1642, 0.0
      %v1771 = vmax.f32 %v1643, 0.0
      %v1772 = vmax.f32 %v1644, 0.0
      %v1773 = vmax.f32 %v1645, 0.0
      %v1774 = vmax.f32 %v1646, 0.0
      %v1775 = vmax.f32 %v1647, 0.0
      %v1776 = vmax.f32 %v1648, 0.0
      %v1777 = vmax.f32 %v1649, 0.0
      %v1778 = vmax.f32 %v1650, 0.0
      %v1779 = vmax.f32 %v1651, 0.0
      %v1780 = vmax.f32 %v1652, 0.0
      %v1781 = vmax.f32 %v1653, 0.0
      %v1782 = vmax.f32 %v1654, 0.0
      %v1783 = vmax.f32 %v1655, 0.0
      %v1784 = vmax.f32 %v1656, 0.0
      %v1785 = vmax.f32 %v1657, 0.0
      %v1786 = vmax.f32 %v1658, 0.0
      %v1787 = vmax.f32 %v1659, 0.0
      %v1788 = vmax.f32 %v1660, 0.0
      %v1789 = vmax.f32 %v1661, 0.0
      %v1790 = vmax.f32 %v1662, 0.0
      %v1791 = vmax.f32 %v1663, 0.0
      %v1792 = vmax.f32 %v1664, 0.0
      %v1793 = vmax.f32 %v1665, 0.0
      %v1794 = vmax.f32 %v1666, 0.0
      %v1795 = vmax.f32 %v1667, 0.0
      %v1796 = vmax.f32 %v1668, 0.0
      %v1797 = vmax.f32 %v1669, 0.0
      %v1798 = vmax.f32 %v1670, 0.0
      %v1799 = vmax.f32 %v1671, 0.0
      %v1800 = vmax.f32 %v1672, 0.0
      %v1801 = vmax.f32 %v1673, 0.0
      %v1802 = vpack.c.bf16 %v1675, %v1674
      %v1803 = vpack.c.bf16 %v1677, %v1676
      %v1804 = vpack.c.bf16 %v1679, %v1678
      %v1805 = vpack.c.bf16 %v1681, %v1680
      %v1806 = vpack.c.bf16 %v1683, %v1682
      %v1807 = vpack.c.bf16 %v1685, %v1684
      %v1808 = vpack.c.bf16 %v1687, %v1686
      %v1809 = vpack.c.bf16 %v1689, %v1688
      %v1810 = vpack.c.bf16 %v1691, %v1690
      %v1811 = vpack.c.bf16 %v1693, %v1692
      %v1812 = vpack.c.bf16 %v1695, %v1694
      %v1813 = vpack.c.bf16 %v1697, %v1696
      %v1814 = vpack.c.bf16 %v1699, %v1698
      %v1815 = vpack.c.bf16 %v1701, %v1700
      %v1816 = vpack.c.bf16 %v1703, %v1702
      %v1817 = vpack.c.bf16 %v1705, %v1704
      %v1818 = vpack.c.bf16 %v1707, %v1706
      %v1819 = vpack.c.bf16 %v1709, %v1708
      %v1820 = vpack.c.bf16 %v1711, %v1710
      %v1821 = vpack.c.bf16 %v1713, %v1712
      %v1822 = vpack.c.bf16 %v1715, %v1714
      %v1823 = vpack.c.bf16 %v1717, %v1716
      %v1824 = vpack.c.bf16 %v1719, %v1718
      %v1825 = vpack.c.bf16 %v1721, %v1720
      %v1826 = vpack.c.bf16 %v1723, %v1722
      %v1827 = vpack.c.bf16 %v1725, %v1724
      %v1828 = vpack.c.bf16 %v1727, %v1726
      %v1829 = vpack.c.bf16 %v1729, %v1728
      %v1830 = vpack.c.bf16 %v1731, %v1730
      %v1831 = vpack.c.bf16 %v1733, %v1732
      %v1832 = vpack.c.bf16 %v1735, %v1734
      %v1833 = vpack.c.bf16 %v1737, %v1736
      %v1834 = vpack.c.bf16 %v1739, %v1738
      %v1835 = vpack.c.bf16 %v1741, %v1740
      %v1836 = vpack.c.bf16 %v1743, %v1742
      %v1837 = vpack.c.bf16 %v1745, %v1744
      %v1838 = vpack.c.bf16 %v1747, %v1746
      %v1839 = vpack.c.bf16 %v1749, %v1748
      %v1840 = vpack.c.bf16 %v1751, %v1750
      %v1841 = vpack.c.bf16 %v1753, %v1752
      %v1842 = vpack.c.bf16 %v1755, %v1754
      %v1843 = vpack.c.bf16 %v1757, %v1756
      %v1844 = vpack.c.bf16 %v1759, %v1758
      %v1845 = vpack.c.bf16 %v1761, %v1760
      %v1846 = vpack.c.bf16 %v1763, %v1762
      %v1847 = vpack.c.bf16 %v1765, %v1764
      %v1848 = vpack.c.bf16 %v1767, %v1766
      %v1849 = vpack.c.bf16 %v1769, %v1768
      %v1850 = vpack.c.bf16 %v1771, %v1770
      %v1851 = vpack.c.bf16 %v1773, %v1772
      %v1852 = vpack.c.bf16 %v1775, %v1774
      %v1853 = vpack.c.bf16 %v1777, %v1776
      %v1854 = vpack.c.bf16 %v1779, %v1778
      %v1855 = vpack.c.bf16 %v1781, %v1780
      %v1856 = vpack.c.bf16 %v1783, %v1782
      %v1857 = vpack.c.bf16 %v1785, %v1784
      %v1858 = vpack.c.bf16 %v1787, %v1786
      %v1859 = vpack.c.bf16 %v1789, %v1788
      %v1860 = vpack.c.bf16 %v1791, %v1790
      %v1861 = vpack.c.bf16 %v1793, %v1792
      %v1862 = vpack.c.bf16 %v1795, %v1794
      %v1863 = vpack.c.bf16 %v1797, %v1796
      %v1864 = vpack.c.bf16 %v1799, %v1798
      %v1865 = vpack.c.bf16 %v1801, %v1800
      %v1930 = vunpack.c.l.b16 %v1802
      %v1931 = vunpack.c.h.b16 %v1802
      %v1932 = vunpack.c.l.b16 %v1803
      %v1933 = vunpack.c.h.b16 %v1803
      %v1934 = vunpack.c.l.b16 %v1804
      %v1935 = vunpack.c.h.b16 %v1804
      %v1936 = vunpack.c.l.b16 %v1805
      %v1937 = vunpack.c.h.b16 %v1805
      %v1938 = vunpack.c.l.b16 %v1806
      %v1939 = vunpack.c.h.b16 %v1806
      %v1940 = vunpack.c.l.b16 %v1807
      %v1941 = vunpack.c.h.b16 %v1807
      %v1942 = vunpack.c.l.b16 %v1808
      %v1943 = vunpack.c.h.b16 %v1808
      %v1944 = vunpack.c.l.b16 %v1809
      %v1945 = vunpack.c.h.b16 %v1809
      %v1946 = vunpack.c.l.b16 %v1810
      %v1947 = vunpack.c.h.b16 %v1810
      %v1948 = vunpack.c.l.b16 %v1811
      %v1949 = vunpack.c.h.b16 %v1811
      %v1950 = vunpack.c.l.b16 %v1812
      %v1951 = vunpack.c.h.b16 %v1812
      %v1952 = vunpack.c.l.b16 %v1813
      %v1953 = vunpack.c.h.b16 %v1813
      %v1954 = vunpack.c.l.b16 %v1814
      %v1955 = vunpack.c.h.b16 %v1814
      %v1956 = vunpack.c.l.b16 %v1815
      %v1957 = vunpack.c.h.b16 %v1815
      %v1958 = vunpack.c.l.b16 %v1816
      %v1959 = vunpack.c.h.b16 %v1816
      %v1960 = vunpack.c.l.b16 %v1817
      %v1961 = vunpack.c.h.b16 %v1817
      %v1962 = vunpack.c.l.b16 %v1818
      %v1963 = vunpack.c.h.b16 %v1818
      %v1964 = vunpack.c.l.b16 %v1819
      %v1965 = vunpack.c.h.b16 %v1819
      %v1966 = vunpack.c.l.b16 %v1820
      %v1967 = vunpack.c.h.b16 %v1820
      %v1968 = vunpack.c.l.b16 %v1821
      %v1969 = vunpack.c.h.b16 %v1821
      %v1970 = vunpack.c.l.b16 %v1822
      %v1971 = vunpack.c.h.b16 %v1822
      %v1972 = vunpack.c.l.b16 %v1823
      %v1973 = vunpack.c.h.b16 %v1823
      %v1974 = vunpack.c.l.b16 %v1824
      %v1975 = vunpack.c.h.b16 %v1824
      %v1976 = vunpack.c.l.b16 %v1825
      %v1977 = vunpack.c.h.b16 %v1825
      %v1978 = vunpack.c.l.b16 %v1826
      %v1979 = vunpack.c.h.b16 %v1826
      %v1980 = vunpack.c.l.b16 %v1827
      %v1981 = vunpack.c.h.b16 %v1827
      %v1982 = vunpack.c.l.b16 %v1828
      %v1983 = vunpack.c.h.b16 %v1828
      %v1984 = vunpack.c.l.b16 %v1829
      %v1985 = vunpack.c.h.b16 %v1829
      %v1986 = vunpack.c.l.b16 %v1830
      %v1987 = vunpack.c.h.b16 %v1830
      %v1988 = vunpack.c.l.b16 %v1831
      %v1989 = vunpack.c.h.b16 %v1831
      %v1990 = vunpack.c.l.b16 %v1832
      %v1991 = vunpack.c.h.b16 %v1832
      %v1992 = vunpack.c.l.b16 %v1833
      %v1993 = vunpack.c.h.b16 %v1833
      %v1994 = vunpack.c.l.b16 %v1834
      %v1995 = vunpack.c.h.b16 %v1834
      %v1996 = vunpack.c.l.b16 %v1835
      %v1997 = vunpack.c.h.b16 %v1835
      %v1998 = vunpack.c.l.b16 %v1836
      %v1999 = vunpack.c.h.b16 %v1836
      %v2000 = vunpack.c.l.b16 %v1837
      %v2001 = vunpack.c.h.b16 %v1837
      %v2002 = vunpack.c.l.b16 %v1838
      %v2003 = vunpack.c.h.b16 %v1838
      %v2004 = vunpack.c.l.b16 %v1839
      %v2005 = vunpack.c.h.b16 %v1839
      %v2006 = vunpack.c.l.b16 %v1840
      %v2007 = vunpack.c.h.b16 %v1840
      %v2008 = vunpack.c.l.b16 %v1841
      %v2009 = vunpack.c.h.b16 %v1841
      %v2010 = vunpack.c.l.b16 %v1842
      %v2011 = vunpack.c.h.b16 %v1842
      %v2012 = vunpack.c.l.b16 %v1843
      %v2013 = vunpack.c.h.b16 %v1843
      %v2014 = vunpack.c.l.b16 %v1844
      %v2015 = vunpack.c.h.b16 %v1844
      %v2016 = vunpack.c.l.b16 %v1845
      %v2017 = vunpack.c.h.b16 %v1845
      %v2018 = vunpack.c.l.b16 %v1846
      %v2019 = vunpack.c.h.b16 %v1846
      %v2020 = vunpack.c.l.b16 %v1847
      %v2021 = vunpack.c.h.b16 %v1847
      %v2022 = vunpack.c.l.b16 %v1848
      %v2023 = vunpack.c.h.b16 %v1848
      %v2024 = vunpack.c.l.b16 %v1849
      %v2025 = vunpack.c.h.b16 %v1849
      %v2026 = vunpack.c.l.b16 %v1850
      %v2027 = vunpack.c.h.b16 %v1850
      %v2028 = vunpack.c.l.b16 %v1851
      %v2029 = vunpack.c.h.b16 %v1851
      %v2030 = vunpack.c.l.b16 %v1852
      %v2031 = vunpack.c.h.b16 %v1852
      %v2032 = vunpack.c.l.b16 %v1853
      %v2033 = vunpack.c.h.b16 %v1853
      %v2034 = vunpack.c.l.b16 %v1854
      %v2035 = vunpack.c.h.b16 %v1854
      %v2036 = vunpack.c.l.b16 %v1855
      %v2037 = vunpack.c.h.b16 %v1855
      %v2038 = vunpack.c.l.b16 %v1856
      %v2039 = vunpack.c.h.b16 %v1856
      %v2040 = vunpack.c.l.b16 %v1857
      %v2041 = vunpack.c.h.b16 %v1857
      %v2042 = vunpack.c.l.b16 %v1858
      %v2043 = vunpack.c.h.b16 %v1858
      %v2044 = vunpack.c.l.b16 %v1859
      %v2045 = vunpack.c.h.b16 %v1859
      %v2046 = vunpack.c.l.b16 %v1860
      %v2047 = vunpack.c.h.b16 %v1860
      %v2048 = vunpack.c.l.b16 %v1861
      %v2049 = vunpack.c.h.b16 %v1861
      %v2050 = vunpack.c.l.b16 %v1862
      %v2051 = vunpack.c.h.b16 %v1862
      %v2052 = vunpack.c.l.b16 %v1863
      %v2053 = vunpack.c.h.b16 %v1863
      %v2054 = vunpack.c.l.b16 %v1864
      %v2055 = vunpack.c.h.b16 %v1864
      %v2056 = vunpack.c.l.b16 %v1865
      %v2057 = vunpack.c.h.b16 %v1865
      %v2058 = vpack.c.b16 %v1930, %v1930
      %v2059 = vpack.c.b16 %v1931, %v1931
      %v2060 = vpack.c.b16 %v1932, %v1932
      %v2061 = vpack.c.b16 %v1933, %v1933
      %v2062 = vpack.c.b16 %v1934, %v1934
      %v2063 = vpack.c.b16 %v1935, %v1935
      %v2064 = vpack.c.b16 %v1936, %v1936
      %v2065 = vpack.c.b16 %v1937, %v1937
      %v2066 = vpack.c.b16 %v1938, %v1938
      %v2067 = vpack.c.b16 %v1939, %v1939
      %v2068 = vpack.c.b16 %v1940, %v1940
      %v2069 = vpack.c.b16 %v1941, %v1941
      %v2070 = vpack.c.b16 %v1942, %v1942
      %v2071 = vpack.c.b16 %v1943, %v1943
      %v2072 = vpack.c.b16 %v1944, %v1944
      %v2073 = vpack.c.b16 %v1945, %v1945
      %v2074 = vpack.c.b16 %v1946, %v1946
      %v2075 = vpack.c.b16 %v1947, %v1947
      %v2076 = vpack.c.b16 %v1948, %v1948
      %v2077 = vpack.c.b16 %v1949, %v1949
      %v2078 = vpack.c.b16 %v1950, %v1950
      %v2079 = vpack.c.b16 %v1951, %v1951
      %v2080 = vpack.c.b16 %v1952, %v1952
      %v2081 = vpack.c.b16 %v1953, %v1953
      %v2082 = vpack.c.b16 %v1954, %v1954
      %v2083 = vpack.c.b16 %v1955, %v1955
      %v2084 = vpack.c.b16 %v1956, %v1956
      %v2085 = vpack.c.b16 %v1957, %v1957
      %v2086 = vpack.c.b16 %v1958, %v1958
      %v2087 = vpack.c.b16 %v1959, %v1959
      %v2088 = vpack.c.b16 %v1960, %v1960
      %v2089 = vpack.c.b16 %v1961, %v1961
      %v2090 = vpack.c.b16 %v1962, %v1962
      %v2091 = vpack.c.b16 %v1963, %v1963
      %v2092 = vpack.c.b16 %v1964, %v1964
      %v2093 = vpack.c.b16 %v1965, %v1965
      %v2094 = vpack.c.b16 %v1966, %v1966
      %v2095 = vpack.c.b16 %v1967, %v1967
      %v2096 = vpack.c.b16 %v1968, %v1968
      %v2097 = vpack.c.b16 %v1969, %v1969
      %v2098 = vpack.c.b16 %v1970, %v1970
      %v2099 = vpack.c.b16 %v1971, %v1971
      %v2100 = vpack.c.b16 %v1972, %v1972
      %v2101 = vpack.c.b16 %v1973, %v1973
      %v2102 = vpack.c.b16 %v1974, %v1974
      %v2103 = vpack.c.b16 %v1975, %v1975
      %v2104 = vpack.c.b16 %v1976, %v1976
      %v2105 = vpack.c.b16 %v1977, %v1977
      %v2106 = vpack.c.b16 %v1978, %v1978
      %v2107 = vpack.c.b16 %v1979, %v1979
      %v2108 = vpack.c.b16 %v1980, %v1980
      %v2109 = vpack.c.b16 %v1981, %v1981
      %v2110 = vpack.c.b16 %v1982, %v1982
      %v2111 = vpack.c.b16 %v1983, %v1983
      %v2112 = vpack.c.b16 %v1984, %v1984
      %v2113 = vpack.c.b16 %v1985, %v1985
      %v2114 = vpack.c.b16 %v1986, %v1986
      %v2115 = vpack.c.b16 %v1987, %v1987
      %v2116 = vpack.c.b16 %v1988, %v1988
      %v2117 = vpack.c.b16 %v1989, %v1989
      %v2118 = vpack.c.b16 %v1990, %v1990
      %v2119 = vpack.c.b16 %v1991, %v1991
      %v2120 = vpack.c.b16 %v1992, %v1992
      %v2121 = vpack.c.b16 %v1993, %v1993
      %v2122 = vpack.c.b16 %v1994, %v1994
      %v2123 = vpack.c.b16 %v1995, %v1995
      %v2124 = vpack.c.b16 %v1996, %v1996
      %v2125 = vpack.c.b16 %v1997, %v1997
      %v2126 = vpack.c.b16 %v1998, %v1998
      %v2127 = vpack.c.b16 %v1999, %v1999
      %v2128 = vpack.c.b16 %v2000, %v2000
      %v2129 = vpack.c.b16 %v2001, %v2001
      %v2130 = vpack.c.b16 %v2002, %v2002
      %v2131 = vpack.c.b16 %v2003, %v2003
      %v2132 = vpack.c.b16 %v2004, %v2004
      %v2133 = vpack.c.b16 %v2005, %v2005
      %v2134 = vpack.c.b16 %v2006, %v2006
      %v2135 = vpack.c.b16 %v2007, %v2007
      %v2136 = vpack.c.b16 %v2008, %v2008
      %v2137 = vpack.c.b16 %v2009, %v2009
      %v2138 = vpack.c.b16 %v2010, %v2010
      %v2139 = vpack.c.b16 %v2011, %v2011
      %v2140 = vpack.c.b16 %v2012, %v2012
      %v2141 = vpack.c.b16 %v2013, %v2013
      %v2142 = vpack.c.b16 %v2014, %v2014
      %v2143 = vpack.c.b16 %v2015, %v2015
      %v2144 = vpack.c.b16 %v2016, %v2016
      %v2145 = vpack.c.b16 %v2017, %v2017
      %v2146 = vpack.c.b16 %v2018, %v2018
      %v2147 = vpack.c.b16 %v2019, %v2019
      %v2148 = vpack.c.b16 %v2020, %v2020
      %v2149 = vpack.c.b16 %v2021, %v2021
      %v2150 = vpack.c.b16 %v2022, %v2022
      %v2151 = vpack.c.b16 %v2023, %v2023
      %v2152 = vpack.c.b16 %v2024, %v2024
      %v2153 = vpack.c.b16 %v2025, %v2025
      %v2154 = vpack.c.b16 %v2026, %v2026
      %v2155 = vpack.c.b16 %v2027, %v2027
      %v2156 = vpack.c.b16 %v2028, %v2028
      %v2157 = vpack.c.b16 %v2029, %v2029
      %v2158 = vpack.c.b16 %v2030, %v2030
      %v2159 = vpack.c.b16 %v2031, %v2031
      %v2160 = vpack.c.b16 %v2032, %v2032
      %v2161 = vpack.c.b16 %v2033, %v2033
      %v2162 = vpack.c.b16 %v2034, %v2034
      %v2163 = vpack.c.b16 %v2035, %v2035
      %v2164 = vpack.c.b16 %v2036, %v2036
      %v2165 = vpack.c.b16 %v2037, %v2037
      %v2166 = vpack.c.b16 %v2038, %v2038
      %v2167 = vpack.c.b16 %v2039, %v2039
      %v2168 = vpack.c.b16 %v2040, %v2040
      %v2169 = vpack.c.b16 %v2041, %v2041
      %v2170 = vpack.c.b16 %v2042, %v2042
      %v2171 = vpack.c.b16 %v2043, %v2043
      %v2172 = vpack.c.b16 %v2044, %v2044
      %v2173 = vpack.c.b16 %v2045, %v2045
      %v2174 = vpack.c.b16 %v2046, %v2046
      %v2175 = vpack.c.b16 %v2047, %v2047
      %v2176 = vpack.c.b16 %v2048, %v2048
      %v2177 = vpack.c.b16 %v2049, %v2049
      %v2178 = vpack.c.b16 %v2050, %v2050
      %v2179 = vpack.c.b16 %v2051, %v2051
      %v2180 = vpack.c.b16 %v2052, %v2052
      %v2181 = vpack.c.b16 %v2053, %v2053
      %v2182 = vpack.c.b16 %v2054, %v2054
      %v2183 = vpack.c.b16 %v2055, %v2055
      %v2184 = vpack.c.b16 %v2056, %v2056
      %v2185 = vpack.c.b16 %v2057, %v2057
      %2314 = vst [vmem:[%s199] sm:$0xf] %v2058
      %2315 = vst [vmem:[%s199 + $0x4] sm:$0xf] %v2059
      %2316 = vst [vmem:[%s199 + $0x8] sm:$0xf] %v2060
      %2317 = vst [vmem:[%s199 + $0xc] sm:$0xf] %v2061
      %2318 = vst [vmem:[%s199 + $0x10] sm:$0xf] %v2062
      %2319 = vst [vmem:[%s199 + $0x14] sm:$0xf] %v2063
      %2320 = vst [vmem:[%s199 + $0x18] sm:$0xf] %v2064
      %2321 = vst [vmem:[%s199 + $0x1c] sm:$0xf] %v2065
      %2322 = vst [vmem:[%s199 + $0x20] sm:$0xf] %v2066
      %2323 = vst [vmem:[%s199 + $0x24] sm:$0xf] %v2067
      %2324 = vst [vmem:[%s199 + $0x28] sm:$0xf] %v2068
      %2325 = vst [vmem:[%s199 + $0x2c] sm:$0xf] %v2069
      %2326 = vst [vmem:[%s199 + $0x30] sm:$0xf] %v2070
      %2327 = vst [vmem:[%s199 + $0x34] sm:$0xf] %v2071
      %2328 = vst [vmem:[%s199 + $0x38] sm:$0xf] %v2072
      %2329 = vst [vmem:[%s199 + $0x3c] sm:$0xf] %v2073
      %2330 = vst [vmem:[%s199 + $0x40] sm:$0xf] %v2074
      %2331 = vst [vmem:[%s199 + $0x44] sm:$0xf] %v2075
      %2332 = vst [vmem:[%s199 + $0x48] sm:$0xf] %v2076
      %2333 = vst [vmem:[%s199 + $0x4c] sm:$0xf] %v2077
      %2334 = vst [vmem:[%s199 + $0x50] sm:$0xf] %v2078
      %2335 = vst [vmem:[%s199 + $0x54] sm:$0xf] %v2079
      %2336 = vst [vmem:[%s199 + $0x58] sm:$0xf] %v2080
      %2337 = vst [vmem:[%s199 + $0x5c] sm:$0xf] %v2081
      %2338 = vst [vmem:[%s199 + $0x60] sm:$0xf] %v2082
      %2339 = vst [vmem:[%s199 + $0x64] sm:$0xf] %v2083
      %2340 = vst [vmem:[%s199 + $0x68] sm:$0xf] %v2084
      %2341 = vst [vmem:[%s199 + $0x6c] sm:$0xf] %v2085
      %2342 = vst [vmem:[%s199 + $0x70] sm:$0xf] %v2086
      %2343 = vst [vmem:[%s199 + $0x74] sm:$0xf] %v2087
      %2344 = vst [vmem:[%s199 + $0x78] sm:$0xf] %v2088
      %2345 = vst [vmem:[%s199 + $0x7c] sm:$0xf] %v2089
      %2346 = vst [vmem:[%s199 + $0x80] sm:$0xf] %v2090
      %2347 = vst [vmem:[%s199 + $0x84] sm:$0xf] %v2091
      %2348 = vst [vmem:[%s199 + $0x88] sm:$0xf] %v2092
      %2349 = vst [vmem:[%s199 + $0x8c] sm:$0xf] %v2093
      %2350 = vst [vmem:[%s199 + $0x90] sm:$0xf] %v2094
      %2351 = vst [vmem:[%s199 + $0x94] sm:$0xf] %v2095
      %2352 = vst [vmem:[%s199 + $0x98] sm:$0xf] %v2096
      %2353 = vst [vmem:[%s199 + $0x9c] sm:$0xf] %v2097
      %2354 = vst [vmem:[%s199 + $0xa0] sm:$0xf] %v2098
      %2355 = vst [vmem:[%s199 + $0xa4] sm:$0xf] %v2099
      %2356 = vst [vmem:[%s199 + $0xa8] sm:$0xf] %v2100
      %2357 = vst [vmem:[%s199 + $0xac] sm:$0xf] %v2101
      %2358 = vst [vmem:[%s199 + $0xb0] sm:$0xf] %v2102
      %2359 = vst [vmem:[%s199 + $0xb4] sm:$0xf] %v2103
      %2360 = vst [vmem:[%s199 + $0xb8] sm:$0xf] %v2104
      %2361 = vst [vmem:[%s199 + $0xbc] sm:$0xf] %v2105
      %2362 = vst [vmem:[%s199 + $0xc0] sm:$0xf] %v2106
      %2363 = vst [vmem:[%s199 + $0xc4] sm:$0xf] %v2107
      %2364 = vst [vmem:[%s199 + $0xc8] sm:$0xf] %v2108
      %2365 = vst [vmem:[%s199 + $0xcc] sm:$0xf] %v2109
      %2366 = vst [vmem:[%s199 + $0xd0] sm:$0xf] %v2110
      %2367 = vst [vmem:[%s199 + $0xd4] sm:$0xf] %v2111
      %2368 = vst [vmem:[%s199 + $0xd8] sm:$0xf] %v2112
      %2369 = vst [vmem:[%s199 + $0xdc] sm:$0xf] %v2113
      %2370 = vst [vmem:[%s199 + $0xe0] sm:$0xf] %v2114
      %2371 = vst [vmem:[%s199 + $0xe4] sm:$0xf] %v2115
      %2372 = vst [vmem:[%s199 + $0xe8] sm:$0xf] %v2116
      %2373 = vst [vmem:[%s199 + $0xec] sm:$0xf] %v2117
      %2374 = vst [vmem:[%s199 + $0xf0] sm:$0xf] %v2118
      %2375 = vst [vmem:[%s199 + $0xf4] sm:$0xf] %v2119
      %2376 = vst [vmem:[%s199 + $0xf8] sm:$0xf] %v2120
      %2377 = vst [vmem:[%s199 + $0xfc] sm:$0xf] %v2121
      %2378 = vst [vmem:[%s199 + $0x100] sm:$0xf] %v2122
      %2379 = vst [vmem:[%s199 + $0x104] sm:$0xf] %v2123
      %2380 = vst [vmem:[%s199 + $0x108] sm:$0xf] %v2124
      %2381 = vst [vmem:[%s199 + $0x10c] sm:$0xf] %v2125
      %2382 = vst [vmem:[%s199 + $0x110] sm:$0xf] %v2126
      %2383 = vst [vmem:[%s199 + $0x114] sm:$0xf] %v2127
      %2384 = vst [vmem:[%s199 + $0x118] sm:$0xf] %v2128
      %2385 = vst [vmem:[%s199 + $0x11c] sm:$0xf] %v2129
      %2386 = vst [vmem:[%s199 + $0x120] sm:$0xf] %v2130
      %2387 = vst [vmem:[%s199 + $0x124] sm:$0xf] %v2131
      %2388 = vst [vmem:[%s199 + $0x128] sm:$0xf] %v2132
      %2389 = vst [vmem:[%s199 + $0x12c] sm:$0xf] %v2133
      %2390 = vst [vmem:[%s199 + $0x130] sm:$0xf] %v2134
      %2391 = vst [vmem:[%s199 + $0x134] sm:$0xf] %v2135
      %2392 = vst [vmem:[%s199 + $0x138] sm:$0xf] %v2136
      %2393 = vst [vmem:[%s199 + $0x13c] sm:$0xf] %v2137
      %2394 = vst [vmem:[%s199 + $0x140] sm:$0xf] %v2138
      %2395 = vst [vmem:[%s199 + $0x144] sm:$0xf] %v2139
      %2396 = vst [vmem:[%s199 + $0x148] sm:$0xf] %v2140
      %2397 = vst [vmem:[%s199 + $0x14c] sm:$0xf] %v2141
      %2398 = vst [vmem:[%s199 + $0x150] sm:$0xf] %v2142
      %2399 = vst [vmem:[%s199 + $0x154] sm:$0xf] %v2143
      %2400 = vst [vmem:[%s199 + $0x158] sm:$0xf] %v2144
      %2401 = vst [vmem:[%s199 + $0x15c] sm:$0xf] %v2145
      %2402 = vst [vmem:[%s199 + $0x160] sm:$0xf] %v2146
      %2403 = vst [vmem:[%s199 + $0x164] sm:$0xf] %v2147
      %2404 = vst [vmem:[%s199 + $0x168] sm:$0xf] %v2148
      %2405 = vst [vmem:[%s199 + $0x16c] sm:$0xf] %v2149
      %2406 = vst [vmem:[%s199 + $0x170] sm:$0xf] %v2150
      %2407 = vst [vmem:[%s199 + $0x174] sm:$0xf] %v2151
      %2408 = vst [vmem:[%s199 + $0x178] sm:$0xf] %v2152
      %2409 = vst [vmem:[%s199 + $0x17c] sm:$0xf] %v2153
      %2410 = vst [vmem:[%s199 + $0x180] sm:$0xf] %v2154
      %2411 = vst [vmem:[%s199 + $0x184] sm:$0xf] %v2155
      %2412 = vst [vmem:[%s199 + $0x188] sm:$0xf] %v2156
      %2413 = vst [vmem:[%s199 + $0x18c] sm:$0xf] %v2157
      %2414 = vst [vmem:[%s199 + $0x190] sm:$0xf] %v2158
      %2415 = vst [vmem:[%s199 + $0x194] sm:$0xf] %v2159
      %2416 = vst [vmem:[%s199 + $0x198] sm:$0xf] %v2160
      %2417 = vst [vmem:[%s199 + $0x19c] sm:$0xf] %v2161
      %2418 = vst [vmem:[%s199 + $0x1a0] sm:$0xf] %v2162
      %2419 = vst [vmem:[%s199 + $0x1a4] sm:$0xf] %v2163
      %2420 = vst [vmem:[%s199 + $0x1a8] sm:$0xf] %v2164
      %2421 = vst [vmem:[%s199 + $0x1ac] sm:$0xf] %v2165
      %2422 = vst [vmem:[%s199 + $0x1b0] sm:$0xf] %v2166
      %2423 = vst [vmem:[%s199 + $0x1b4] sm:$0xf] %v2167
      %2424 = vst [vmem:[%s199 + $0x1b8] sm:$0xf] %v2168
      %2425 = vst [vmem:[%s199 + $0x1bc] sm:$0xf] %v2169
      %2426 = vst [vmem:[%s199 + $0x1c0] sm:$0xf] %v2170
      %2427 = vst [vmem:[%s199 + $0x1c4] sm:$0xf] %v2171
      %2428 = vst [vmem:[%s199 + $0x1c8] sm:$0xf] %v2172
      %2429 = vst [vmem:[%s199 + $0x1cc] sm:$0xf] %v2173
      %2430 = vst [vmem:[%s199 + $0x1d0] sm:$0xf] %v2174
      %2431 = vst [vmem:[%s199 + $0x1d4] sm:$0xf] %v2175
      %2432 = vst [vmem:[%s199 + $0x1d8] sm:$0xf] %v2176
      %2433 = vst [vmem:[%s199 + $0x1dc] sm:$0xf] %v2177
      %2434 = vst [vmem:[%s199 + $0x1e0] sm:$0xf] %v2178
      %2435 = vst [vmem:[%s199 + $0x1e4] sm:$0xf] %v2179
      %2436 = vst [vmem:[%s199 + $0x1e8] sm:$0xf] %v2180
      %2437 = vst [vmem:[%s199 + $0x1ec] sm:$0xf] %v2181
      %2438 = vst [vmem:[%s199 + $0x1f0] sm:$0xf] %v2182
      %2439 = vst [vmem:[%s199 + $0x1f4] sm:$0xf] %v2183
      %2440 = vst [vmem:[%s199 + $0x1f8] sm:$0xf] %v2184
      %2441 = vst [vmem:[%s199 + $0x1fc] sm:$0xf] %v2185
      %s2442 = smul.u32 128, %s15
      %p2443 = scmp.lt.s32.totalorder %s2442, 6271
      %s2444 = scalar_select %p2443, %s2442, 6271
      %s2445 = smul.addr %s2444, 4
      %s2446 = scalar_lea.vmem %s4, %s2445
      // Predicated region
      $region37: #{conv_bn_act.1} parent=35 // pred_check
        %p2447 = pneg %p122
      $region38: #{conv_bn_act.1} parent=35 // pred_check_branch
        %2449 = sbr.rel (%p2447) target = $region40
      $region39: #{conv_bn_act.1} parent=35 // pred_region
        %s2450 = smul.u32 128, %s15
      $region40: #{conv_bn_act.1} parent=35 // pred_fallthru
        _
    $region36: #{conv_bn_act.1} parent=5 // pred_fallthru
      _
    %p2451 = scmp.le.s32.totalorder 2, %s10
    // Predicated region
    $region41: #{conv_bn_act.1} parent=5 // pred_check
      %p2452 = pneg %p2451
    $region42: #{conv_bn_act.1} parent=5 // pred_check_branch
      %2454 = sbr.rel (%p2452) target = $region44
    $region43: #{conv_bn_act.1} parent=5 // pred_region
      %s2455 = ssub.s32 %s10, 2
      // Predicated region
      $region45: #{conv_bn_act.1} parent=43 // pred_check
        %p2456 = pneg %p128
      $region46: #{conv_bn_act.1} parent=43 // pred_check_branch
        %2458 = sbr.rel (%p2456) target = $region48
      $region47: #{conv_bn_act.1} parent=43 // pred_region
        %s2459 = smul.u32 128, %s16
        %p2460 = scmp.lt.s32.totalorder %s2459, 6271
        %s2461 = scalar_select %p2460, %s2459, 6271
        %s2462 = smul.addr %s2461, 4
        %s2463 = scalar_lea.vmem %s4, %s2462
      $region48: #{conv_bn_act.1} parent=43 // pred_fallthru
        _
    $region44: #{conv_bn_act.1} parent=5 // pred_fallthru
      _
  $region6: #{conv_bn_act.1} parent=0 // loop_footer
    %s14 = sadd.s32 1, %s10
  $region7: #{conv_bn_act.1} parent=0 // loop_footer_branch
    %9 = sbr.rel target = $region3
  $region8: #{conv_bn_act.1} parent=0 // loop_exit
    _

</llo_original>
